<compile_context>
chip_gen: v7x
topology: tpu7x:2x2x1
jax: 0.10.0
libtpu: 0.0.40
codegen_flags: <defaults>
</compile_context>

<pallas_src>
import numpy as np
import jax
import jax.numpy as jnp
from jax import lax
from jax.experimental import pallas as pl
from jax.experimental.pallas import tpu as pltpu

KSIZE = 7        # SpatialAttention conv kernel size
PAD = 3          # (7 - 1) // 2
EPSILON = 1e-10  # from SpatialAttentionBlock (negligible vs. sigmoid form)


def fusion_kernel(x1_ref, x2_ref, att_w_ref, w3a_ref, w3b_ref, b3_ref,
                  dbias_ref, out_ref):
    B, C, HW = x1_ref.shape
    Cout = out_ref.shape[1]

    # --- SpatialAttention: channel mean / max maps, reduced in f32 ---
    x1f = x1_ref[...].astype(jnp.float32)             # (B, C, HW)
    x2f = x2_ref[...].astype(jnp.float32)
    avg1 = jnp.mean(x1f, axis=1)                       # (B, HW)
    mx1 = jnp.max(x1f, axis=1)
    avg2 = jnp.mean(x2f, axis=1)
    mx2 = jnp.max(x2f, axis=1)

    # ConvSNP = ReLU -> Conv2d(2->1, 7x7, pad=3).  Both branches' convs, their
    # biases and /(1-lam) scalings are folded into att_w / dbias so that ONE
    # bf16 MXU matmul yields d = att1 - att2.
    l = jnp.concatenate(
        [jnp.maximum(avg1, 0.0), jnp.maximum(mx1, 0.0),
         jnp.maximum(avg2, 0.0), jnp.maximum(mx2, 0.0)],
        axis=-1).astype(jnp.bfloat16)                  # (B, 4*HW)
    d = jnp.dot(l, att_w_ref[...],
                preferred_element_type=jnp.float32) + dbias_ref[0]   # (B, HW)

    # Two-branch softmax == sigmoid of the logit difference (eps ~ 1e-10 is
    # negligible); numerically stable, one transcendental.
    m1 = 1.0 / (1.0 + jnp.exp(-d))                     # (B, HW) f32
    m1b = m1.astype(jnp.bfloat16)
    m2b = (1.0 - m1).astype(jnp.bfloat16)

    # --- drp: ReLU -> 1x1 conv over cat([m1*x1, m2*x2], channel) ---
    w3a = w3a_ref[...]                                 # (Cout, C) bf16
    w3b = w3b_ref[...]
    b3 = jnp.broadcast_to(b3_ref[...], (Cout, HW))     # hoisted: built once
    for b in range(B):                                 # static, unrolled
        f1 = jnp.maximum(x1_ref[b] * m1b[b:b + 1], 0.0)    # (C, HW) bf16
        f2 = jnp.maximum(x2_ref[b] * m2b[b:b + 1], 0.0)
        acc = jnp.dot(w3a, f1, preferred_element_type=jnp.float32)
        acc = acc + jnp.dot(w3b, f2, preferred_element_type=jnp.float32)
        out_ref[b] = (acc + b3).astype(out_ref.dtype)


def _conv_matrix(w_hwi, H, W):
    """Fold (7,7,2) conv taps into a (2*H*W, H*W) matrix.

    att_flat = concat([avg_flat, max_flat], axis=-1) @ M  is the zero-padded
    7x7 conv with those taps (flat index = i*W + j, row-major).
    """
    HW = H * W
    rs = np.stack([np.eye(H, H, k=PAD - di, dtype=np.float32) for di in range(KSIZE)])
    cs = np.stack([np.eye(W, W, k=PAD - dj, dtype=np.float32) for dj in range(KSIZE)])
    a = jnp.einsum("ijc,iqp,jde->cqdpe", w_hwi.astype(jnp.float32),
                   jnp.asarray(rs), jnp.asarray(cs))          # (2, H, W, H, W)
    return a.reshape(2 * HW, HW)


def _choose_batch_block(n, cap=32):
    """Pick (batch_block, padded_n).

    * keeps the block large (amortizes per-step overhead + weight streaming),
    * keeps >= 2 grid steps when n >= 2 (both v7x TensorCores),
    * pads awkward n instead of collapsing to B=1.
    """
    if n <= 1:
        return 1, max(n, 1)
    cap = max(1, min(cap, n // 2))        # guarantee at least 2 grid steps
    best = 1
    for d in range(1, cap + 1):
        if n % d == 0:
            best = d
    if best * 2 <= cap:                   # divisor too small -> pad the batch
        return cap, ((n + cap - 1) // cap) * cap
    return best, n


def fusion_forward(x1_nchw, x2_nchw, params, *, batch_cap=32):
    N, C, H, W = x1_nchw.shape
    HW = H * W
    Cout = params["w3"].shape[1]

    # bf16 activations for HBM I/O and the MXU; accumulation stays f32.
    x1 = x1_nchw.astype(jnp.bfloat16).reshape(N, C, HW)
    x2 = x2_nchw.astype(jnp.bfloat16).reshape(N, C, HW)

    lam1 = jnp.asarray(params["lam1"], jnp.float32)
    lam2 = jnp.asarray(params["lam2"], jnp.float32)
    lam3 = jnp.asarray(params["lam3"], jnp.float32)

    # Fold both 7x7 convs (+ biases, + 1/(1-lam)) into a single matrix / scalar
    # computing d = att1 - att2.
    a1 = _conv_matrix(params["w1"], H, W) / (1.0 - lam1)      # (2HW, HW)
    a2 = _conv_matrix(params["w2"], H, W) / (1.0 - lam2)
    att_w = jnp.concatenate([a1, -a2], axis=0).astype(jnp.bfloat16)   # (4HW, HW)
    dbias = (jnp.asarray(params["b1"], jnp.float32) / (1.0 - lam1)
             - jnp.asarray(params["b2"], jnp.float32) / (1.0 - lam2)).reshape(1)

    # drp 1x1 conv, /(1-lam3) folded; weights pre-split to avoid an in-kernel
    # sublane concat.
    w3t = jnp.transpose(params["w3"].astype(jnp.float32)) / (1.0 - lam3)  # (Cout, 2C)
    w3a = w3t[:, :C].astype(jnp.bfloat16)
    w3b = w3t[:, C:].astype(jnp.bfloat16)
    b3 = (params["b3"].astype(jnp.float32) / (1.0 - lam3)).reshape(Cout, 1)

    B, Npad = _choose_batch_block(N, batch_cap)
    if Npad != N:
        pad = ((0, Npad - N), (0, 0), (0, 0))
        x1 = jnp.pad(x1, pad)
        x2 = jnp.pad(x2, pad)

    out = pl.pallas_call(
        fusion_kernel,
        out_shape=jax.ShapeDtypeStruct((Npad, Cout, HW), jnp.float32),
        grid=(Npad // B,),
        in_specs=[
            pl.BlockSpec((B, C, HW), lambda i: (i, 0, 0)),
            pl.BlockSpec((B, C, HW), lambda i: (i, 0, 0)),
            pl.BlockSpec((4 * HW, HW), lambda i: (0, 0)),
            pl.BlockSpec((Cout, C), lambda i: (0, 0)),
            pl.BlockSpec((Cout, C), lambda i: (0, 0)),
            pl.BlockSpec((Cout, 1), lambda i: (0, 0)),
            pl.BlockSpec(memory_space=pltpu.MemorySpace.SMEM),
        ],
        out_specs=pl.BlockSpec((B, Cout, HW), lambda i: (i, 0, 0)),
        compiler_params=pltpu.CompilerParams(
            dimension_semantics=("parallel",),
            vmem_limit_bytes=40 * 1024 * 1024),
    )(x1, x2, att_w, w3a, w3b, b3, dbias)

    return out[:N].reshape(N, Cout, H, W)


def fusion_reference(x1, x2, params):
    prec = lax.Precision.HIGHEST

    def spatial_att(x, w_hwi, b, lam):
        avg = jnp.mean(x, axis=1, keepdims=True)
        mx = jnp.max(x, axis=1, keepdims=True)
        c = jnp.concatenate([avg, mx], axis=1)          # (N, 2, H, W)
        c = jax.nn.relu(c)
        w_oihw = jnp.transpose(w_hwi, (2, 0, 1))[None]  # (1, 2, 7, 7)
        out = lax.conv_general_dilated(
            c, w_oihw, window_strides=(1, 1),
            padding=((PAD, PAD), (PAD, PAD)),
            dimension_numbers=("NCHW", "OIHW", "NCHW"),
            precision=prec)
        out = out + b
        return out / (1.0 - lam)

    a1 = spatial_att(x1, params["w1"], params["b1"], params["lam1"])
    a2 = spatial_att(x2, params["w2"], params["b2"], params["lam2"])
    e1, e2 = jnp.exp(a1), jnp.exp(a2)
    m1 = e1 / (e1 + e2 + EPSILON)
    m2 = e2 / (e1 + e2 + EPSILON)
    f = jnp.concatenate([m1 * x1, m2 * x2], axis=1)     # (N, 128, H, W)
    f = jax.nn.relu(f)
    out = jnp.einsum("nchw,co->nohw", f, params["w3"], precision=prec)
    out = out + params["b3"].reshape(1, -1, 1, 1)
    return out / (1.0 - params["lam3"])


if __name__ == "__main__":
    key = jax.random.PRNGKey(0)
    k = jax.random.split(key, 6)
    # x1, x2 must have 64 channels each (cat -> 128 channels for drp 1x1 conv)
    N, C, H, W = 2, 64, 16, 16
    Cout = 64

    x1 = jax.random.normal(k[0], (N, C, H, W), dtype=jnp.float32)
    x2 = jax.random.normal(k[1], (N, C, H, W), dtype=jnp.float32)

    params = {
        # SpatialAttention conv weights, layout (kh, kw, cin) with cin 0=avg, 1=max
        "w1": jax.random.normal(k[2], (KSIZE, KSIZE, 2), dtype=jnp.float32) * 0.05,
        "b1": jnp.float32(0.01),
        "w2": jax.random.normal(k[3], (KSIZE, KSIZE, 2), dtype=jnp.float32) * 0.05,
        "b2": jnp.float32(-0.01),
        # drp 1x1 conv weights, layout (cin=128, cout=64)
        "w3": jax.random.normal(k[4], (2 * C, Cout), dtype=jnp.float32) * 0.05,
        "b3": jax.random.normal(k[5], (Cout,), dtype=jnp.float32) * 0.05,
        # ConvSNP lamda_ parameters (init 0.001)
        "lam1": jnp.float32(0.001),
        "lam2": jnp.float32(0.001),
        "lam3": jnp.float32(0.001),
    }

    out = jax.block_until_ready(fusion_forward(x1, x2, params))
    ref = jax.block_until_ready(fusion_reference(x1, x2, params))

    assert out.shape == (N, Cout, H, W), out.shape
    # bf16 I/O + bf16 MXU operands, f32 accumulation / output.
    np.testing.assert_allclose(np.asarray(out), np.asarray(ref), rtol=1e-2, atol=1e-2)
    print("KERNEL_OK")
</pallas_src>

<mosaic_0001>
module attributes {stable_mosaic.version = 11 : i64} {
  func.func @fusion_kernel(%arg0: i32, %arg1: memref<1x64x256xbf16, #tpu.memory_space<vmem>>, %arg2: memref<1x64x256xbf16, #tpu.memory_space<vmem>>, %arg3: memref<1024x256xbf16, #tpu.memory_space<vmem>>, %arg4: memref<64x64xbf16, #tpu.memory_space<vmem>>, %arg5: memref<64x64xbf16, #tpu.memory_space<vmem>>, %arg6: memref<64x1xf32, #tpu.memory_space<vmem>>, %arg7: memref<1xf32, #tpu.memory_space<smem>>, %arg8: memref<1x64x256xf32, #tpu.memory_space<vmem>>) attributes {dimension_semantics = [#tpu.dimension_semantics<parallel>], iteration_bounds = array<i64: 2>, scalar_prefetch = 0 : i64, scratch_operands = 0 : i64, tpu.core_type = #tpu.core_type<tc>, window_params = [{transform_indices = @transform_0, window_bounds = array<i64: 1, 64, 256>}, {transform_indices = @transform_1, window_bounds = array<i64: 1, 64, 256>}, {pipeline_mode = #tpu.pipeline_mode<synchronous>, transform_indices = @transform_2, window_bounds = array<i64: 1024, 256>}, {pipeline_mode = #tpu.pipeline_mode<synchronous>, transform_indices = @transform_3, window_bounds = array<i64: 64, 64>}, {pipeline_mode = #tpu.pipeline_mode<synchronous>, transform_indices = @transform_4, window_bounds = array<i64: 64, 64>}, {pipeline_mode = #tpu.pipeline_mode<synchronous>, transform_indices = @transform_5, window_bounds = array<i64: 64, 1>}, {transform_indices = @transform_6, window_bounds = array<i64: 1>}, {transform_indices = @transform_7, window_bounds = array<i64: 1, 64, 256>}]} {
    %c0 = arith.constant 0 : index
    %c0_0 = arith.constant 0 : index
    %c0_1 = arith.constant 0 : index
    %0 = vector.load %arg1[%c0, %c0_0, %c0_1] : memref<1x64x256xbf16, #tpu.memory_space<vmem>>, vector<1x64x256xbf16>
    %1 = arith.extf %0 : vector<1x64x256xbf16> to vector<1x64x256xf32>
    %c0_2 = arith.constant 0 : index
    %c0_3 = arith.constant 0 : index
    %c0_4 = arith.constant 0 : index
    %2 = vector.load %arg2[%c0_2, %c0_3, %c0_4] : memref<1x64x256xbf16, #tpu.memory_space<vmem>>, vector<1x64x256xbf16>
    %3 = arith.extf %2 : vector<1x64x256xbf16> to vector<1x64x256xf32>
    %cst = arith.constant dense<0.000000e+00> : vector<1x256xf32>
    %4 = vector.multi_reduction <add>, %1, %cst [1] : vector<1x64x256xf32> to vector<1x256xf32>
    %cst_5 = arith.constant 6.400000e+01 : f32
    %5 = vector.broadcast %cst_5 : f32 to vector<1x256xf32>
    %6 = arith.divf %4, %5 : vector<1x256xf32>
    %cst_6 = arith.constant dense<0xFF800000> : vector<1x256xf32>
    %7 = vector.multi_reduction <maximumf>, %1, %cst_6 [1] : vector<1x64x256xf32> to vector<1x256xf32>
    %cst_7 = arith.constant dense<0.000000e+00> : vector<1x256xf32>
    %8 = vector.multi_reduction <add>, %3, %cst_7 [1] : vector<1x64x256xf32> to vector<1x256xf32>
    %cst_8 = arith.constant 6.400000e+01 : f32
    %9 = vector.broadcast %cst_8 : f32 to vector<1x256xf32>
    %10 = arith.divf %8, %9 : vector<1x256xf32>
    %cst_9 = arith.constant dense<0xFF800000> : vector<1x256xf32>
    %11 = vector.multi_reduction <maximumf>, %3, %cst_9 [1] : vector<1x64x256xf32> to vector<1x256xf32>
    %cst_10 = arith.constant 0.000000e+00 : f32
    %12 = vector.broadcast %cst_10 : f32 to vector<1x256xf32>
    %13 = arith.maximumf %6, %12 : vector<1x256xf32>
    %cst_11 = arith.constant 0.000000e+00 : f32
    %14 = vector.broadcast %cst_11 : f32 to vector<1x256xf32>
    %15 = arith.maximumf %7, %14 : vector<1x256xf32>
    %cst_12 = arith.constant 0.000000e+00 : f32
    %16 = vector.broadcast %cst_12 : f32 to vector<1x256xf32>
    %17 = arith.maximumf %10, %16 : vector<1x256xf32>
    %cst_13 = arith.constant 0.000000e+00 : f32
    %18 = vector.broadcast %cst_13 : f32 to vector<1x256xf32>
    %19 = arith.maximumf %11, %18 : vector<1x256xf32>
    %20 = tpu.concatenate %13, %15, %17, %19 in 1 : vector<1x256xf32>, vector<1x256xf32>, vector<1x256xf32>, vector<1x256xf32> -> vector<1x1024xf32>
    %21 = arith.truncf %20 : vector<1x1024xf32> to vector<1x1024xbf16>
    %c0_14 = arith.constant 0 : index
    %c0_15 = arith.constant 0 : index
    %22 = vector.load %arg3[%c0_14, %c0_15] : memref<1024x256xbf16, #tpu.memory_space<vmem>>, vector<1024x256xbf16>
    %cst_16 = arith.constant dense<0.000000e+00> : vector<1x256xf32>
    %23 = tpu.matmul %21, %22, %cst_16 {dimension_numbers = #tpu.dot_dimension_numbers<[1], [0], [0], [1], [0, 0, 1, 1], [], []>} : vector<1x1024xbf16>, vector<1024x256xbf16>, vector<1x256xf32> -> vector<1x256xf32>
    %c0_17 = arith.constant 0 : index
    %24 = memref.load %arg7[%c0_17] : memref<1xf32, #tpu.memory_space<smem>>
    %25 = vector.broadcast %24 : f32 to vector<1x256xf32>
    %26 = arith.addf %23, %25 : vector<1x256xf32>
    %cst_18 = arith.constant 0.000000e+00 : f32
    %27 = vector.broadcast %cst_18 : f32 to vector<1x256xf32>
    %28 = arith.subf %27, %26 : vector<1x256xf32>
    %29 = math.exp %28 : vector<1x256xf32>
    %cst_19 = arith.constant 1.000000e+00 : f32
    %30 = vector.broadcast %cst_19 : f32 to vector<1x256xf32>
    %31 = arith.addf %30, %29 : vector<1x256xf32>
    %cst_20 = arith.constant 1.000000e+00 : f32
    %32 = vector.broadcast %cst_20 : f32 to vector<1x256xf32>
    %33 = arith.divf %32, %31 : vector<1x256xf32>
    %34 = arith.truncf %33 : vector<1x256xf32> to vector<1x256xbf16>
    %cst_21 = arith.constant 1.000000e+00 : f32
    %35 = vector.broadcast %cst_21 : f32 to vector<1x256xf32>
    %36 = arith.subf %35, %33 : vector<1x256xf32>
    %37 = arith.truncf %36 : vector<1x256xf32> to vector<1x256xbf16>
    %c0_22 = arith.constant 0 : index
    %c0_23 = arith.constant 0 : index
    %38 = vector.load %arg4[%c0_22, %c0_23] : memref<64x64xbf16, #tpu.memory_space<vmem>>, vector<64x64xbf16>
    %c0_24 = arith.constant 0 : index
    %c0_25 = arith.constant 0 : index
    %39 = vector.load %arg5[%c0_24, %c0_25] : memref<64x64xbf16, #tpu.memory_space<vmem>>, vector<64x64xbf16>
    %c0_26 = arith.constant 0 : index
    %c0_27 = arith.constant 0 : index
    %40 = vector.load %arg6[%c0_26, %c0_27] : memref<64x1xf32, #tpu.memory_space<vmem>>, vector<64x1xf32>
    %41 = vector.shape_cast %40 : vector<64x1xf32> to vector<64x1xf32>
    %42 = vector.broadcast %41 : vector<64x1xf32> to vector<64x256xf32>
    %c0_28 = arith.constant 0 : index
    %c0_29 = arith.constant 0 : index
    %c0_30 = arith.constant 0 : index
    %43 = vector.load %arg1[%c0_28, %c0_29, %c0_30] : memref<1x64x256xbf16, #tpu.memory_space<vmem>>, vector<1x64x256xbf16>
    %44 = vector.shape_cast %43 : vector<1x64x256xbf16> to vector<64x256xbf16>
    %45 = vector.broadcast %34 : vector<1x256xbf16> to vector<64x256xbf16>
    %46 = arith.mulf %44, %45 : vector<64x256xbf16>
    %cst_31 = arith.constant 0.000000e+00 : bf16
    %47 = vector.broadcast %cst_31 : bf16 to vector<64x256xbf16>
    %48 = arith.maximumf %46, %47 : vector<64x256xbf16>
    %c0_32 = arith.constant 0 : index
    %c0_33 = arith.constant 0 : index
    %c0_34 = arith.constant 0 : index
    %49 = vector.load %arg2[%c0_32, %c0_33, %c0_34] : memref<1x64x256xbf16, #tpu.memory_space<vmem>>, vector<1x64x256xbf16>
    %50 = vector.shape_cast %49 : vector<1x64x256xbf16> to vector<64x256xbf16>
    %51 = vector.broadcast %37 : vector<1x256xbf16> to vector<64x256xbf16>
    %52 = arith.mulf %50, %51 : vector<64x256xbf16>
    %cst_35 = arith.constant 0.000000e+00 : bf16
    %53 = vector.broadcast %cst_35 : bf16 to vector<64x256xbf16>
    %54 = arith.maximumf %52, %53 : vector<64x256xbf16>
    %cst_36 = arith.constant dense<0.000000e+00> : vector<64x256xf32>
    %55 = tpu.matmul %38, %48, %cst_36 {dimension_numbers = #tpu.dot_dimension_numbers<[1], [0], [0], [1], [0, 0, 1, 1], [], []>} : vector<64x64xbf16>, vector<64x256xbf16>, vector<64x256xf32> -> vector<64x256xf32>
    %cst_37 = arith.constant dense<0.000000e+00> : vector<64x256xf32>
    %56 = tpu.matmul %39, %54, %cst_37 {dimension_numbers = #tpu.dot_dimension_numbers<[1], [0], [0], [1], [0, 0, 1, 1], [], []>} : vector<64x64xbf16>, vector<64x256xbf16>, vector<64x256xf32> -> vector<64x256xf32>
    %57 = arith.addf %55, %56 : vector<64x256xf32>
    %58 = arith.addf %57, %42 : vector<64x256xf32>
    %c0_38 = arith.constant 0 : index
    %c0_39 = arith.constant 0 : index
    %c0_40 = arith.constant 0 : index
    %59 = vector.load %arg8[%c0_38, %c0_39, %c0_40] : memref<1x64x256xf32, #tpu.memory_space<vmem>>, vector<1x64x256xf32>
    %60 = vector.shape_cast %59 : vector<1x64x256xf32> to vector<64x256xf32>
    %61 = vector.shape_cast %58 : vector<64x256xf32> to vector<1x64x256xf32>
    tpu.vector_store %arg8[%c0_38, %c0_39, %c0_40], %61 {strides = array<i32>} : memref<1x64x256xf32, #tpu.memory_space<vmem>>, vector<1x64x256xf32>,
    return
  }
  func.func @transform_0(%arg0: i32) -> (i32, i32, i32) {
    %c0_i32 = arith.constant 0 : i32
    %c0_i32_0 = arith.constant 0 : i32
    %c0_i32_1 = arith.constant 0 : i32
    return %arg0, %c0_i32, %c0_i32_0 : i32, i32, i32
  }
  func.func @transform_1(%arg0: i32) -> (i32, i32, i32) {
    %c0_i32 = arith.constant 0 : i32
    %c0_i32_0 = arith.constant 0 : i32
    %c0_i32_1 = arith.constant 0 : i32
    return %arg0, %c0_i32, %c0_i32_0 : i32, i32, i32
  }
  func.func @transform_2(%arg0: i32) -> (i32, i32) {
    %c0_i32 = arith.constant 0 : i32
    %c0_i32_0 = arith.constant 0 : i32
    %c0_i32_1 = arith.constant 0 : i32
    return %c0_i32, %c0_i32_0 : i32, i32
  }
  func.func @transform_3(%arg0: i32) -> (i32, i32) {
    %c0_i32 = arith.constant 0 : i32
    %c0_i32_0 = arith.constant 0 : i32
    %c0_i32_1 = arith.constant 0 : i32
    return %c0_i32, %c0_i32_0 : i32, i32
  }
  func.func @transform_4(%arg0: i32) -> (i32, i32) {
    %c0_i32 = arith.constant 0 : i32
    %c0_i32_0 = arith.constant 0 : i32
    %c0_i32_1 = arith.constant 0 : i32
    return %c0_i32, %c0_i32_0 : i32, i32
  }
  func.func @transform_5(%arg0: i32) -> (i32, i32) {
    %c0_i32 = arith.constant 0 : i32
    %c0_i32_0 = arith.constant 0 : i32
    %c0_i32_1 = arith.constant 0 : i32
    return %c0_i32, %c0_i32_0 : i32, i32
  }
  func.func @transform_6(%arg0: i32) -> i32 {
    %c0_i32 = arith.constant 0 : i32
    %c0_i32_0 = arith.constant 0 : i32
    return %c0_i32 : i32
  }
  func.func @transform_7(%arg0: i32) -> (i32, i32, i32) {
    %c0_i32 = arith.constant 0 : i32
    %c0_i32_0 = arith.constant 0 : i32
    %c0_i32_1 = arith.constant 0 : i32
    return %arg0, %c0_i32, %c0_i32_0 : i32, i32, i32
  }
}

</mosaic_0001>

<llo_original>
// kernel: tpu_custom_call.1
$region0: #{tpu_custom_call.1}
  #allocation0 [shape = 'u32[]', space=smem, size = 0x4, offset = 0x4, fixed_abs, tag = 'smem constant byte address 0x4 - core index']
  #allocation1 [shape = 'u32[144,128]{1,0:T(1,128)}', space=vmem, size = 0x12000, scoped, tag = 'internal scratch']
  #allocation2 [shape = 'f32[1]{0:T(128)S(6)}', space=smem, size = 0x200, scoped, tag = 'scoped memory for tpu_custom_call.1']
  %s0 = inlined_call_operand.hbm [shape: bf16[2,64,256], index: 0, kind: input, shape index: {}]
  %s1 = inlined_call_operand.hbm [shape: bf16[2,64,256], index: 1, kind: input, shape index: {}]
  %s2 = inlined_call_operand.hbm [shape: bf16[1024,256], index: 2, kind: input, shape index: {}]
  %s3 = inlined_call_operand.vmem [shape: bf16[64,64], index: 3, kind: input, shape index: {}]
  %s4 = inlined_call_operand.vmem [shape: bf16[64,64], index: 4, kind: input, shape index: {}]
  %s5 = inlined_call_operand.vmem [shape: f32[64,1], index: 5, kind: input, shape index: {}]
  %s6 = inlined_call_operand.<no memory space> [shape: f32[1], index: 6, kind: input, shape index: {}]
  %s7 = inlined_call_operand.hbm [shape: f32[2,64,256], index: 7, kind: output, shape index: {}]
  %s8 = sld [smem:[#allocation0]]
  $region73: #{tpu_custom_call.1} parent=0
    _
  %s10 = ssub.s32 1, %s8
  %s11 = scalar_select 0, %s10, %s8
  %12 = sst [smem:[#allocation2]] %s6
  $region1: #{tpu_custom_call.1} parent=0
    #allocation3 [shape = 'u8[65536]{0}', space=vmem, size = 0x10000, scoped, tag = 'input window, operand 0']
    #allocation4 [shape = 's32[2]{0}', space=sflag, size = 0x8, scoped, tag = 'scoped memory for tpu_custom_call.1']
    #allocation5 [shape = 's32[2]{0}', space=sflag, size = 0x8, scoped, tag = 'scoped memory for tpu_custom_call.1']
    #allocation6 [shape = 'u8[65536]{0}', space=vmem, size = 0x10000, scoped, tag = 'input window, operand 1']
    #allocation7 [shape = 's32[2]{0}', space=sflag, size = 0x8, scoped, tag = 'scoped memory for tpu_custom_call.1']
    #allocation8 [shape = 'u8[524288]{0}', space=vmem, size = 0x80000, scoped, tag = 'input window, operand 2, single buffered']
    #allocation9 [shape = 'u8[131072]{0}', space=vmem, size = 0x20000, scoped, tag = 'output window, operand 0']
    %13 = vsyncpa [#allocation4], 0
    %s14 = scalar_lea.sflag [#allocation4], 1
    %15 = vsyncpa %s14, 0
    %16 = vsyncpa [#allocation7], 0
    %s17 = scalar_lea.sflag [#allocation7], 1
    %18 = vsyncpa %s17, 0
    %19 = vsyncpa [#allocation5], 0
    %s20 = scalar_lea.sflag [#allocation5], 1
    %21 = vsyncpa %s20, 0
    loop: start=0, step=1, limit=4
    $region2: #{tpu_custom_call.1} parent=1 // loop_pre_header
      _
    $region3: #{tpu_custom_call.1} parent=1 // loop_header
      %s23 = sphi 0, %s27
      %p24 = scmp.ge.s32.totalorder %s23, 4
      %s33 = sphi 0, %s35
      %s36 = sphi 0, %s33
      %s37 = sphi 0, %s36
      %s53 = sphi 0, %s37
      %s59 = sphi 0, %s61
      %s62 = sphi 0, %s59
      %s63 = sphi 0, %s62
      %s79 = sphi 0, %s63
      %s83 = sphi 0, %s83
      %s85 = sphi 0, %s83
      %s86 = sphi 0, %s85
      %s100 = sphi 0, %s86
      %s104 = sphi 0, %s104
      %s106 = sphi 0, %s104
      %s107 = sphi 0, %s106
      %s121 = sphi 0, %s107
      %s125 = sphi 0, %s125
      %s127 = sphi 0, %s125
      %s128 = sphi 0, %s127
      %s142 = sphi 0, %s128
      %s146 = sphi 0, %s146
      %s148 = sphi 0, %s146
      %s149 = sphi 0, %s148
      %s163 = sphi 0, %s149
      %s167 = sphi 0, %s167
      %s169 = sphi 0, %s167
      %s170 = sphi 0, %s169
      %s184 = sphi 0, %s170
      %s190 = sphi 0, %s192
      %s193 = sphi 0, %s190
      %s194 = sphi 0, %s193
      %s210 = sphi 0, %s194
    $region4: #{tpu_custom_call.1} parent=1 // loop_header_branch
      %26 = sbr.rel (%p24) target = $region8
    $region5: #{tpu_custom_call.1} parent=1 // loop_body
      %s28 = ssub.s32 %s23, 1
      %s29 = ssub.s32 %s23, 2
      %s30 = sadd.s32 %s23, 1
      %s31 = ssub.s32 %s23, %s30
      %p32 = scmp.eq.s32.totalorder %s31, 0
      %s34 = sadd.s32 %s33, 1
      %s35 = scalar_select %p32, %s33, %s34
      %p38 = pneg %p32
      %p39 = scmp.eq.s32.totalorder %s23, 1
      %p40 = por %p38, %p39
      %p41 = scmp.ne.s32.totalorder %s33, %s36
      %p42 = scmp.eq.s32.totalorder %s23, 0
      %p43 = por %p41, %p42
      %p44 = scmp.ne.s32.totalorder %s33, %s36
      %p45 = scmp.eq.s32.totalorder %s28, 1
      %p46 = por %p44, %p45
      %p47 = scmp.ne.s32.totalorder %s36, %s37
      %p48 = scmp.eq.s32.totalorder %s28, 0
      %p49 = por %p47, %p48
      %p50 = scmp.ne.s32.totalorder %s36, %s37
      %p51 = scmp.eq.s32.totalorder %s29, 1
      %p52 = por %p50, %p51
      %p54 = scmp.ne.s32.totalorder %s37, %s53
      %p55 = scmp.eq.s32.totalorder %s29, 0
      %p56 = por %p54, %p55
      %s57 = ssub.s32 %s23, %s30
      %p58 = scmp.eq.s32.totalorder %s57, 0
      %s60 = sadd.s32 %s59, 1
      %s61 = scalar_select %p58, %s59, %s60
      %p64 = pneg %p58
      %p65 = scmp.eq.s32.totalorder %s23, 1
      %p66 = por %p64, %p65
      %p67 = scmp.ne.s32.totalorder %s59, %s62
      %p68 = scmp.eq.s32.totalorder %s23, 0
      %p69 = por %p67, %p68
      %p70 = scmp.ne.s32.totalorder %s59, %s62
      %p71 = scmp.eq.s32.totalorder %s28, 1
      %p72 = por %p70, %p71
      %p73 = scmp.ne.s32.totalorder %s62, %s63
      %p74 = scmp.eq.s32.totalorder %s28, 0
      %p75 = por %p73, %p74
      %p76 = scmp.ne.s32.totalorder %s62, %s63
      %p77 = scmp.eq.s32.totalorder %s29, 1
      %p78 = por %p76, %p77
      %p80 = scmp.ne.s32.totalorder %s63, %s79
      %p81 = scmp.eq.s32.totalorder %s29, 0
      %p82 = por %p80, %p81
      %s84 = sadd.s32 %s83, 1
      %p87 = scmp.eq.s32.totalorder %s23, 1
      %p88 = scmp.ne.s32.totalorder %s83, %s85
      %p89 = scmp.eq.s32.totalorder %s23, 0
      %p90 = por %p88, %p89
      %p91 = scmp.ne.s32.totalorder %s83, %s85
      %p92 = scmp.eq.s32.totalorder %s28, 1
      %p93 = por %p91, %p92
      %p94 = scmp.ne.s32.totalorder %s85, %s86
      %p95 = scmp.eq.s32.totalorder %s28, 0
      %p96 = por %p94, %p95
      %p97 = scmp.ne.s32.totalorder %s85, %s86
      %p98 = scmp.eq.s32.totalorder %s29, 1
      %p99 = por %p97, %p98
      %p101 = scmp.ne.s32.totalorder %s86, %s100
      %p102 = scmp.eq.s32.totalorder %s29, 0
      %p103 = por %p101, %p102
      %s105 = sadd.s32 %s104, 1
      %p108 = scmp.eq.s32.totalorder %s23, 1
      %p109 = scmp.ne.s32.totalorder %s104, %s106
      %p110 = scmp.eq.s32.totalorder %s23, 0
      %p111 = por %p109, %p110
      %p112 = scmp.ne.s32.totalorder %s104, %s106
      %p113 = scmp.eq.s32.totalorder %s28, 1
      %p114 = por %p112, %p113
      %p115 = scmp.ne.s32.totalorder %s106, %s107
      %p116 = scmp.eq.s32.totalorder %s28, 0
      %p117 = por %p115, %p116
      %p118 = scmp.ne.s32.totalorder %s106, %s107
      %p119 = scmp.eq.s32.totalorder %s29, 1
      %p120 = por %p118, %p119
      %p122 = scmp.ne.s32.totalorder %s107, %s121
      %p123 = scmp.eq.s32.totalorder %s29, 0
      %p124 = por %p122, %p123
      %s126 = sadd.s32 %s125, 1
      %p129 = scmp.eq.s32.totalorder %s23, 1
      %p130 = scmp.ne.s32.totalorder %s125, %s127
      %p131 = scmp.eq.s32.totalorder %s23, 0
      %p132 = por %p130, %p131
      %p133 = scmp.ne.s32.totalorder %s125, %s127
      %p134 = scmp.eq.s32.totalorder %s28, 1
      %p135 = por %p133, %p134
      %p136 = scmp.ne.s32.totalorder %s127, %s128
      %p137 = scmp.eq.s32.totalorder %s28, 0
      %p138 = por %p136, %p137
      %p139 = scmp.ne.s32.totalorder %s127, %s128
      %p140 = scmp.eq.s32.totalorder %s29, 1
      %p141 = por %p139, %p140
      %p143 = scmp.ne.s32.totalorder %s128, %s142
      %p144 = scmp.eq.s32.totalorder %s29, 0
      %p145 = por %p143, %p144
      %s147 = sadd.s32 %s146, 1
      %p150 = scmp.eq.s32.totalorder %s23, 1
      %p151 = scmp.ne.s32.totalorder %s146, %s148
      %p152 = scmp.eq.s32.totalorder %s23, 0
      %p153 = por %p151, %p152
      %p154 = scmp.ne.s32.totalorder %s146, %s148
      %p155 = scmp.eq.s32.totalorder %s28, 1
      %p156 = por %p154, %p155
      %p157 = scmp.ne.s32.totalorder %s148, %s149
      %p158 = scmp.eq.s32.totalorder %s28, 0
      %p159 = por %p157, %p158
      %p160 = scmp.ne.s32.totalorder %s148, %s149
      %p161 = scmp.eq.s32.totalorder %s29, 1
      %p162 = por %p160, %p161
      %p164 = scmp.ne.s32.totalorder %s149, %s163
      %p165 = scmp.eq.s32.totalorder %s29, 0
      %p166 = por %p164, %p165
      %s168 = sadd.s32 %s167, 1
      %p171 = scmp.eq.s32.totalorder %s23, 1
      %p172 = scmp.ne.s32.totalorder %s167, %s169
      %p173 = scmp.eq.s32.totalorder %s23, 0
      %p174 = por %p172, %p173
      %p175 = scmp.ne.s32.totalorder %s167, %s169
      %p176 = scmp.eq.s32.totalorder %s28, 1
      %p177 = por %p175, %p176
      %p178 = scmp.ne.s32.totalorder %s169, %s170
      %p179 = scmp.eq.s32.totalorder %s28, 0
      %p180 = por %p178, %p179
      %p181 = scmp.ne.s32.totalorder %s169, %s170
      %p182 = scmp.eq.s32.totalorder %s29, 1
      %p183 = por %p181, %p182
      %p185 = scmp.ne.s32.totalorder %s170, %s184
      %p186 = scmp.eq.s32.totalorder %s29, 0
      %p187 = por %p185, %p186
      %s188 = ssub.s32 %s23, %s30
      %p189 = scmp.eq.s32.totalorder %s188, 0
      %s191 = sadd.s32 %s190, 1
      %s192 = scalar_select %p189, %s190, %s191
      %p195 = pneg %p189
      %p196 = scmp.eq.s32.totalorder %s23, 1
      %p197 = por %p195, %p196
      %p198 = scmp.ne.s32.totalorder %s190, %s193
      %p199 = scmp.eq.s32.totalorder %s23, 0
      %p200 = por %p198, %p199
      %p201 = scmp.ne.s32.totalorder %s190, %s193
      %p202 = scmp.eq.s32.totalorder %s28, 1
      %p203 = por %p201, %p202
      %p204 = scmp.ne.s32.totalorder %s193, %s194
      %p205 = scmp.eq.s32.totalorder %s28, 0
      %p206 = por %p204, %p205
      %p207 = scmp.ne.s32.totalorder %s193, %s194
      %p208 = scmp.eq.s32.totalorder %s29, 1
      %p209 = por %p207, %p208
      %p211 = scmp.ne.s32.totalorder %s194, %s210
      %p212 = scmp.eq.s32.totalorder %s29, 0
      %p213 = por %p211, %p212
      %p214 = scmp.le.s32.totalorder 1, %s23
      %p215 = scmp.lt.s32.totalorder %s23, 3
      %p216 = pnand %p214, %p215
      %p217 = pneg %p216
      // Predicated region
      $region9: #{tpu_custom_call.1} parent=5 // pred_check
        _
      $region10: #{tpu_custom_call.1} parent=5 // pred_check_branch
        %219 = sbr.rel (%p216) target = $region12
      $region11: #{tpu_custom_call.1} parent=5 // pred_region
        %s220 = ssub.s32 %s23, 1
        // Predicated region
        $region13: #{tpu_custom_call.1} parent=11 // pred_check
          %p221 = pneg %p96
        $region14: #{tpu_custom_call.1} parent=11 // pred_check_branch
          %223 = sbr.rel (%p221) target = $region16
        $region15: #{tpu_custom_call.1} parent=11 // pred_region
          %s225 = ssub.s32 16384, 16384
          %226 = vsyncadd [#allocation7], %s225
          %s227 = sshll.u32 [#allocation8], 4
          %s228 = int_to_ptr.vmem [resolvable:$true] %s227
          %233 = dma.hbm_to_vmem [thread:$0]  %s2, 16384, %s228, [#allocation7], 128, 128, 8
        $region16: #{tpu_custom_call.1} parent=11 // pred_fallthru
          _
        // Predicated region
        $region17: #{tpu_custom_call.1} parent=11 // pred_check
          %p234 = pneg %p117
        $region18: #{tpu_custom_call.1} parent=11 // pred_check_branch
          %236 = sbr.rel (%p234) target = $region20
        $region19: #{tpu_custom_call.1} parent=11 // pred_region
          _
        $region20: #{tpu_custom_call.1} parent=11 // pred_fallthru
          _
        // Predicated region
        $region21: #{tpu_custom_call.1} parent=11 // pred_check
          %p237 = pneg %p138
        $region22: #{tpu_custom_call.1} parent=11 // pred_check_branch
          %239 = sbr.rel (%p237) target = $region24
        $region23: #{tpu_custom_call.1} parent=11 // pred_region
          _
        $region24: #{tpu_custom_call.1} parent=11 // pred_fallthru
          _
        // Predicated region
        $region25: #{tpu_custom_call.1} parent=11 // pred_check
          %p240 = pneg %p159
        $region26: #{tpu_custom_call.1} parent=11 // pred_check_branch
          %242 = sbr.rel (%p240) target = $region28
        $region27: #{tpu_custom_call.1} parent=11 // pred_region
          _
        $region28: #{tpu_custom_call.1} parent=11 // pred_fallthru
          _
        // Predicated region
        $region29: #{tpu_custom_call.1} parent=11 // pred_check
          %p243 = pneg %p180
        $region30: #{tpu_custom_call.1} parent=11 // pred_check_branch
          %245 = sbr.rel (%p243) target = $region32
        $region31: #{tpu_custom_call.1} parent=11 // pred_region
          _
        $region32: #{tpu_custom_call.1} parent=11 // pred_fallthru
          _
      $region12: #{tpu_custom_call.1} parent=5 // pred_fallthru
        _
      %p246 = scmp.lt.s32.totalorder %s23, 2
      // Predicated region
      $region33: #{tpu_custom_call.1} parent=5 // pred_check
        %p247 = pneg %p246
      $region34: #{tpu_custom_call.1} parent=5 // pred_check_branch
        %249 = sbr.rel (%p247) target = $region36
      $region35: #{tpu_custom_call.1} parent=5 // pred_region
        // Predicated region
        $region37: #{tpu_custom_call.1} parent=35 // pred_check
          %p250 = pneg %p43
        $region38: #{tpu_custom_call.1} parent=35 // pred_check_branch
          %252 = sbr.rel (%p250) target = $region40
        $region39: #{tpu_custom_call.1} parent=35 // pred_region
          %s253 = sand.u32 %s33, 1
          %s254 = scalar_lea.sflag [#allocation4], %s253
          %s255 = sand.u32 %s33, 1
          %s256 = smul.addr %s255, 64
          %s257 = scalar_lea.vmem [#allocation3], %s256
          %s259 = ssub.s32 1024, 1024
          %260 = vsyncadd %s254, %s259
          %s261 = smul.addr %s23, 16
          %s262 = smul.addr %s261, 64
          %s263 = scalar_lea.hbm %s0, %s262
          %s264 = sshll.u32 %s257, 4
          %s265 = int_to_ptr.vmem [resolvable:$true] %s264
          %270 = dma.hbm_to_vmem [thread:$0]  %s263, 1024, %s265, %s254, 128, 128, 8
        $region40: #{tpu_custom_call.1} parent=35 // pred_fallthru
          _
        // Predicated region
        $region41: #{tpu_custom_call.1} parent=35 // pred_check
          %p271 = pneg %p69
        $region42: #{tpu_custom_call.1} parent=35 // pred_check_branch
          %273 = sbr.rel (%p271) target = $region44
        $region43: #{tpu_custom_call.1} parent=35 // pred_region
          %s274 = sand.u32 %s23, 1
          %s275 = scalar_lea.sflag [#allocation7], %s274
          %s276 = sand.u32 %s59, 1
          %s277 = smul.addr %s276, 64
          %s278 = scalar_lea.vmem [#allocation6], %s277
          %s280 = ssub.s32 1024, 1024
          %281 = vsyncadd %s275, %s280
          %s282 = smul.addr %s23, 16
          %s283 = smul.addr %s282, 64
          %s284 = scalar_lea.hbm %s1, %s283
          %s285 = sshll.u32 %s278, 4
          %s286 = int_to_ptr.vmem [resolvable:$true] %s285
          %291 = dma.hbm_to_vmem [thread:$0]  %s284, 1024, %s286, %s275, 128, 128, 8
        $region44: #{tpu_custom_call.1} parent=35 // pred_fallthru
          _
      $region36: #{tpu_custom_call.1} parent=5 // pred_fallthru
        _
      %p292 = scmp.le.s32.totalorder 1, %s23
      %p293 = scmp.lt.s32.totalorder %s23, 3
      %p294 = pnand %p292, %p293
      %p295 = pneg %p294
      // Predicated region
      $region45: #{tpu_custom_call.1} parent=5 // pred_check
        _
      $region46: #{tpu_custom_call.1} parent=5 // pred_check_branch
        %297 = sbr.rel (%p294) target = $region48
      $region47: #{tpu_custom_call.1} parent=5 // pred_region
        %s298 = ssub.s32 %s23, 1
        %s299 = sand.u32 %s36, 1
        %s300 = scalar_lea.sflag [#allocation4], %s299
        %s301 = sand.u32 %s36, 1
        %s302 = smul.addr %s301, 64
        %s303 = scalar_lea.vmem [#allocation3], %s302
        // Predicated region
        $region49: #{tpu_custom_call.1} parent=47 // pred_check
          %p304 = pneg %p49
        $region50: #{tpu_custom_call.1} parent=47 // pred_check_branch
          %306 = sbr.rel (%p304) target = $region52
        $region51: #{tpu_custom_call.1} parent=47 // pred_region
          %307 = dma.done %s300, 1024
        $region52: #{tpu_custom_call.1} parent=47 // pred_fallthru
          _
        %s308 = sand.u32 %s28, 1
        %s309 = scalar_lea.sflag [#allocation7], %s308
        %s310 = sand.u32 %s62, 1
        %s311 = smul.addr %s310, 64
        %s312 = scalar_lea.vmem [#allocation6], %s311
        // Predicated region
        $region53: #{tpu_custom_call.1} parent=47 // pred_check
          %p313 = pneg %p75
        $region54: #{tpu_custom_call.1} parent=47 // pred_check_branch
          %315 = sbr.rel (%p313) target = $region56
        $region55: #{tpu_custom_call.1} parent=47 // pred_region
          %316 = dma.done %s309, 1024
        $region56: #{tpu_custom_call.1} parent=47 // pred_fallthru
          _
        // Predicated region
        $region57: #{tpu_custom_call.1} parent=47 // pred_check
          %p317 = pneg %p96
        $region58: #{tpu_custom_call.1} parent=47 // pred_check_branch
          %319 = sbr.rel (%p317) target = $region60
        $region59: #{tpu_custom_call.1} parent=47 // pred_region
          %320 = dma.done [#allocation7], 16384
        $region60: #{tpu_custom_call.1} parent=47 // pred_fallthru
          _
        %s321 = sand.u32 %s36, 1
        %s322 = scalar_lea.sflag [#allocation4], %s321
        %s323 = sand.u32 %s36, 1
        %s324 = smul.addr %s323, 64
        %s325 = scalar_lea.vmem [#allocation3], %s324
        %p326 = pneg %p49
        %p327 = pneg %p46
        %s328 = sand.u32 %s28, 1
        %s329 = scalar_lea.sflag [#allocation7], %s328
        %s330 = sand.u32 %s62, 1
        %s331 = smul.addr %s330, 64
        %s332 = scalar_lea.vmem [#allocation6], %s331
        %p333 = pneg %p75
        %p334 = pneg %p72
        %p335 = pneg %p96
        %p336 = pneg %p93
        %p337 = pneg %p117
        %p338 = pneg %p114
        %p339 = pneg %p138
        %p340 = pneg %p135
        %p341 = pneg %p159
        %p342 = pneg %p156
        %p343 = pneg %p180
        %p344 = pneg %p177
        %p345 = pneg %p206
        %p346 = pneg %p203
        %s347 = sand.u32 %s193, 1
        %s348 = scalar_lea.sflag [#allocation5], %s347
        %s349 = sand.u32 %s193, 1
        %s350 = smul.addr %s349, 128
        %s351 = scalar_lea.vmem [#allocation9], %s350
        %v353 = vld [vmem:[%s303] sm:$0xff]
        %v354 = vld [vmem:[%s303 + $0x8] sm:$0xff]
        %v355 = vld [vmem:[%s303 + $0x10] sm:$0xff]
        %v356 = vld [vmem:[%s303 + $0x18] sm:$0xff]
        %v357 = vld [vmem:[%s303 + $0x20] sm:$0xff]
        %v358 = vld [vmem:[%s303 + $0x28] sm:$0xff]
        %v359 = vld [vmem:[%s303 + $0x30] sm:$0xff]
        %v360 = vld [vmem:[%s303 + $0x38] sm:$0xff]
        %v361 = vunpack.c.l.bf16 %v353
        %v362 = vunpack.c.h.bf16 %v353
        %v363 = vunpack.c.l.bf16 %v354
        %v364 = vunpack.c.h.bf16 %v354
        %v365 = vunpack.c.l.bf16 %v355
        %v366 = vunpack.c.h.bf16 %v355
        %v367 = vunpack.c.l.bf16 %v356
        %v368 = vunpack.c.h.bf16 %v356
        %v369 = vunpack.c.l.bf16 %v357
        %v370 = vunpack.c.h.bf16 %v357
        %v371 = vunpack.c.l.bf16 %v358
        %v372 = vunpack.c.h.bf16 %v358
        %v373 = vunpack.c.l.bf16 %v359
        %v374 = vunpack.c.h.bf16 %v359
        %v375 = vunpack.c.l.bf16 %v360
        %v376 = vunpack.c.h.bf16 %v360
        %v377 = vld [vmem:[%s312] sm:$0xff]
        %v378 = vld [vmem:[%s312 + $0x8] sm:$0xff]
        %v379 = vld [vmem:[%s312 + $0x10] sm:$0xff]
        %v380 = vld [vmem:[%s312 + $0x18] sm:$0xff]
        %v381 = vld [vmem:[%s312 + $0x20] sm:$0xff]
        %v382 = vld [vmem:[%s312 + $0x28] sm:$0xff]
        %v383 = vld [vmem:[%s312 + $0x30] sm:$0xff]
        %v384 = vld [vmem:[%s312 + $0x38] sm:$0xff]
        %v385 = vunpack.c.l.bf16 %v377
        %v386 = vunpack.c.h.bf16 %v377
        %v387 = vunpack.c.l.bf16 %v378
        %v388 = vunpack.c.h.bf16 %v378
        %v389 = vunpack.c.l.bf16 %v379
        %v390 = vunpack.c.h.bf16 %v379
        %v391 = vunpack.c.l.bf16 %v380
        %v392 = vunpack.c.h.bf16 %v380
        %v393 = vunpack.c.l.bf16 %v381
        %v394 = vunpack.c.h.bf16 %v381
        %v395 = vunpack.c.l.bf16 %v382
        %v396 = vunpack.c.h.bf16 %v382
        %v397 = vunpack.c.l.bf16 %v383
        %v398 = vunpack.c.h.bf16 %v383
        %v399 = vunpack.c.l.bf16 %v384
        %v400 = vunpack.c.h.bf16 %v384
        %v401 = vadd.f32 %v361, %v363
        %v402 = vadd.f32 %v401, %v365
        %v403 = vadd.f32 %v402, %v367
        %v404 = vadd.f32 %v403, %v369
        %v405 = vadd.f32 %v404, %v371
        %v406 = vadd.f32 %v405, %v373
        %v407 = vadd.f32 %v406, %v375
        %v408 = vrot.slane %v407, 4
        %v409 = vadd.f32 %v407, %v408
        %v410 = vrot.slane %v409, 2
        %v411 = vadd.f32 %v409, %v410
        %v412 = vrot.slane %v411, 1
        %v413 = vadd.f32 %v411, %v412
        %v414 = vadd.f32 %v362, %v364
        %v415 = vadd.f32 %v414, %v366
        %v416 = vadd.f32 %v415, %v368
        %v417 = vadd.f32 %v416, %v370
        %v418 = vadd.f32 %v417, %v372
        %v419 = vadd.f32 %v418, %v374
        %v420 = vadd.f32 %v419, %v376
        %v421 = vrot.slane %v420, 4
        %v422 = vadd.f32 %v420, %v421
        %v423 = vrot.slane %v422, 2
        %v424 = vadd.f32 %v422, %v423
        %v425 = vrot.slane %v424, 1
        %v426 = vadd.f32 %v424, %v425
        %v427 = vrcp.pop 64.0
        %v428 = vmul.f32 %v413, %v427
        %v429 = vmul.f32 %v426, %v427
        %v430 = vmax.f32 %v361, %v365
        %v431 = vmax.f32 %v363, %v367
        %v432 = vmax.f32 %v430, %v369
        %v433 = vmax.f32 %v431, %v371
        %v434 = vmax.f32 %v432, %v373
        %v435 = vmax.f32 %v433, %v375
        %v436 = vmax.f32 %v434, %v435
        %v437 = vrot.slane %v436, 4
        %v438 = vmax.f32 %v436, %v437
        %v439 = vrot.slane %v438, 2
        %v440 = vmax.f32 %v438, %v439
        %v441 = vrot.slane %v440, 1
        %v442 = vmax.f32 %v440, %v441
        %v443 = vmax.f32 %v362, %v366
        %v444 = vmax.f32 %v364, %v368
        %v445 = vmax.f32 %v443, %v370
        %v446 = vmax.f32 %v444, %v372
        %v447 = vmax.f32 %v445, %v374
        %v448 = vmax.f32 %v446, %v376
        %v449 = vmax.f32 %v447, %v448
        %v450 = vrot.slane %v449, 4
        %v451 = vmax.f32 %v449, %v450
        %v452 = vrot.slane %v451, 2
        %v453 = vmax.f32 %v451, %v452
        %v454 = vrot.slane %v453, 1
        %v455 = vmax.f32 %v453, %v454
        %v456 = vadd.f32 %v385, %v387
        %v457 = vadd.f32 %v456, %v389
        %v458 = vadd.f32 %v457, %v391
        %v459 = vadd.f32 %v458, %v393
        %v460 = vadd.f32 %v459, %v395
        %v461 = vadd.f32 %v460, %v397
        %v462 = vadd.f32 %v461, %v399
        %v463 = vrot.slane %v462, 4
        %v464 = vadd.f32 %v462, %v463
        %v465 = vrot.slane %v464, 2
        %v466 = vadd.f32 %v464, %v465
        %v467 = vrot.slane %v466, 1
        %v468 = vadd.f32 %v466, %v467
        %v469 = vadd.f32 %v386, %v388
        %v470 = vadd.f32 %v469, %v390
        %v471 = vadd.f32 %v470, %v392
        %v472 = vadd.f32 %v471, %v394
        %v473 = vadd.f32 %v472, %v396
        %v474 = vadd.f32 %v473, %v398
        %v475 = vadd.f32 %v474, %v400
        %v476 = vrot.slane %v475, 4
        %v477 = vadd.f32 %v475, %v476
        %v478 = vrot.slane %v477, 2
        %v479 = vadd.f32 %v477, %v478
        %v480 = vrot.slane %v479, 1
        %v481 = vadd.f32 %v479, %v480
        %v482 = vmul.f32 %v468, %v427
        %v483 = vmul.f32 %v481, %v427
        %v484 = vmax.f32 %v385, %v389
        %v485 = vmax.f32 %v387, %v391
        %v486 = vmax.f32 %v484, %v393
        %v487 = vmax.f32 %v485, %v395
        %v488 = vmax.f32 %v486, %v397
        %v489 = vmax.f32 %v487, %v399
        %v490 = vmax.f32 %v488, %v489
        %v491 = vrot.slane %v490, 4
        %v492 = vmax.f32 %v490, %v491
        %v493 = vrot.slane %v492, 2
        %v494 = vmax.f32 %v492, %v493
        %v495 = vrot.slane %v494, 1
        %v496 = vmax.f32 %v494, %v495
        %v497 = vmax.f32 %v386, %v390
        %v498 = vmax.f32 %v388, %v392
        %v499 = vmax.f32 %v497, %v394
        %v500 = vmax.f32 %v498, %v396
        %v501 = vmax.f32 %v499, %v398
        %v502 = vmax.f32 %v500, %v400
        %v503 = vmax.f32 %v501, %v502
        %v504 = vrot.slane %v503, 4
        %v505 = vmax.f32 %v503, %v504
        %v506 = vrot.slane %v505, 2
        %v507 = vmax.f32 %v505, %v506
        %v508 = vrot.slane %v507, 1
        %v509 = vmax.f32 %v507, %v508
        %v510 = vmax.f32 %v428, 0.0
        %v511 = vmax.f32 %v429, 0.0
        %v512 = vmax.f32 %v442, 0.0
        %v513 = vmax.f32 %v455, 0.0
        %v514 = vmax.f32 %v482, 0.0
        %v515 = vmax.f32 %v483, 0.0
        %v516 = vmax.f32 %v496, 0.0
        %v517 = vmax.f32 %v509, 0.0
        %v518 = vpack.c.bf16 %v510, %v510
        %v519 = vpack.c.bf16 %v511, %v511
        %v520 = vpack.c.bf16 %v512, %v512
        %v521 = vpack.c.bf16 %v513, %v513
        %v522 = vpack.c.bf16 %v514, %v514
        %v523 = vpack.c.bf16 %v515, %v515
        %v524 = vpack.c.bf16 %v516, %v516
        %v525 = vpack.c.bf16 %v517, %v517
        %v526 = vld [vmem:[#allocation8] sm:$0xff]
        %v527 = vld [vmem:[#allocation8 + $0x8] sm:$0xff]
        %v528 = vld [vmem:[#allocation8 + $0x10] sm:$0xff]
        %v529 = vld [vmem:[#allocation8 + $0x18] sm:$0xff]
        %v530 = vld [vmem:[#allocation8 + $0x20] sm:$0xff]
        %v531 = vld [vmem:[#allocation8 + $0x28] sm:$0xff]
        %v532 = vld [vmem:[#allocation8 + $0x30] sm:$0xff]
        %v533 = vld [vmem:[#allocation8 + $0x38] sm:$0xff]
        %v534 = vld [vmem:[#allocation8 + $0x40] sm:$0xff]
        %v535 = vld [vmem:[#allocation8 + $0x48] sm:$0xff]
        %v536 = vld [vmem:[#allocation8 + $0x50] sm:$0xff]
        %v537 = vld [vmem:[#allocation8 + $0x58] sm:$0xff]
        %v538 = vld [vmem:[#allocation8 + $0x60] sm:$0xff]
        %v539 = vld [vmem:[#allocation8 + $0x68] sm:$0xff]
        %v540 = vld [vmem:[#allocation8 + $0x70] sm:$0xff]
        %v541 = vld [vmem:[#allocation8 + $0x78] sm:$0xff]
        %v542 = vld [vmem:[#allocation8 + $0x80] sm:$0xff]
        %v543 = vld [vmem:[#allocation8 + $0x88] sm:$0xff]
        %v544 = vld [vmem:[#allocation8 + $0x90] sm:$0xff]
        %v545 = vld [vmem:[#allocation8 + $0x98] sm:$0xff]
        %v546 = vld [vmem:[#allocation8 + $0xa0] sm:$0xff]
        %v547 = vld [vmem:[#allocation8 + $0xa8] sm:$0xff]
        %v548 = vld [vmem:[#allocation8 + $0xb0] sm:$0xff]
        %v549 = vld [vmem:[#allocation8 + $0xb8] sm:$0xff]
        %v550 = vld [vmem:[#allocation8 + $0xc0] sm:$0xff]
        %v551 = vld [vmem:[#allocation8 + $0xc8] sm:$0xff]
        %v552 = vld [vmem:[#allocation8 + $0xd0] sm:$0xff]
        %v553 = vld [vmem:[#allocation8 + $0xd8] sm:$0xff]
        %v554 = vld [vmem:[#allocation8 + $0xe0] sm:$0xff]
        %v555 = vld [vmem:[#allocation8 + $0xe8] sm:$0xff]
        %v556 = vld [vmem:[#allocation8 + $0xf0] sm:$0xff]
        %v557 = vld [vmem:[#allocation8 + $0xf8] sm:$0xff]
        %v558 = vld [vmem:[#allocation8 + $0x100] sm:$0xff]
        %v559 = vld [vmem:[#allocation8 + $0x108] sm:$0xff]
        %v560 = vld [vmem:[#allocation8 + $0x110] sm:$0xff]
        %v561 = vld [vmem:[#allocation8 + $0x118] sm:$0xff]
        %v562 = vld [vmem:[#allocation8 + $0x120] sm:$0xff]
        %v563 = vld [vmem:[#allocation8 + $0x128] sm:$0xff]
        %v564 = vld [vmem:[#allocation8 + $0x130] sm:$0xff]
        %v565 = vld [vmem:[#allocation8 + $0x138] sm:$0xff]
        %v566 = vld [vmem:[#allocation8 + $0x140] sm:$0xff]
        %v567 = vld [vmem:[#allocation8 + $0x148] sm:$0xff]
        %v568 = vld [vmem:[#allocation8 + $0x150] sm:$0xff]
        %v569 = vld [vmem:[#allocation8 + $0x158] sm:$0xff]
        %v570 = vld [vmem:[#allocation8 + $0x160] sm:$0xff]
        %v571 = vld [vmem:[#allocation8 + $0x168] sm:$0xff]
        %v572 = vld [vmem:[#allocation8 + $0x170] sm:$0xff]
        %v573 = vld [vmem:[#allocation8 + $0x178] sm:$0xff]
        %v574 = vld [vmem:[#allocation8 + $0x180] sm:$0xff]
        %v575 = vld [vmem:[#allocation8 + $0x188] sm:$0xff]
        %v576 = vld [vmem:[#allocation8 + $0x190] sm:$0xff]
        %v577 = vld [vmem:[#allocation8 + $0x198] sm:$0xff]
        %v578 = vld [vmem:[#allocation8 + $0x1a0] sm:$0xff]
        %v579 = vld [vmem:[#allocation8 + $0x1a8] sm:$0xff]
        %v580 = vld [vmem:[#allocation8 + $0x1b0] sm:$0xff]
        %v581 = vld [vmem:[#allocation8 + $0x1b8] sm:$0xff]
        %v582 = vld [vmem:[#allocation8 + $0x1c0] sm:$0xff]
        %v583 = vld [vmem:[#allocation8 + $0x1c8] sm:$0xff]
        %v584 = vld [vmem:[#allocation8 + $0x1d0] sm:$0xff]
        %v585 = vld [vmem:[#allocation8 + $0x1d8] sm:$0xff]
        %v586 = vld [vmem:[#allocation8 + $0x1e0] sm:$0xff]
        %v587 = vld [vmem:[#allocation8 + $0x1e8] sm:$0xff]
        %v588 = vld [vmem:[#allocation8 + $0x1f0] sm:$0xff]
        %v589 = vld [vmem:[#allocation8 + $0x1f8] sm:$0xff]
        %v590 = vld [vmem:[#allocation8 + $0x200] sm:$0xff]
        %v591 = vld [vmem:[#allocation8 + $0x208] sm:$0xff]
        %v592 = vld [vmem:[#allocation8 + $0x210] sm:$0xff]
        %v593 = vld [vmem:[#allocation8 + $0x218] sm:$0xff]
        %v594 = vld [vmem:[#allocation8 + $0x220] sm:$0xff]
        %v595 = vld [vmem:[#allocation8 + $0x228] sm:$0xff]
        %v596 = vld [vmem:[#allocation8 + $0x230] sm:$0xff]
        %v597 = vld [vmem:[#allocation8 + $0x238] sm:$0xff]
        %v598 = vld [vmem:[#allocation8 + $0x240] sm:$0xff]
        %v599 = vld [vmem:[#allocation8 + $0x248] sm:$0xff]
        %v600 = vld [vmem:[#allocation8 + $0x250] sm:$0xff]
        %v601 = vld [vmem:[#allocation8 + $0x258] sm:$0xff]
        %v602 = vld [vmem:[#allocation8 + $0x260] sm:$0xff]
        %v603 = vld [vmem:[#allocation8 + $0x268] sm:$0xff]
        %v604 = vld [vmem:[#allocation8 + $0x270] sm:$0xff]
        %v605 = vld [vmem:[#allocation8 + $0x278] sm:$0xff]
        %v606 = vld [vmem:[#allocation8 + $0x280] sm:$0xff]
        %v607 = vld [vmem:[#allocation8 + $0x288] sm:$0xff]
        %v608 = vld [vmem:[#allocation8 + $0x290] sm:$0xff]
        %v609 = vld [vmem:[#allocation8 + $0x298] sm:$0xff]
        %v610 = vld [vmem:[#allocation8 + $0x2a0] sm:$0xff]
        %v611 = vld [vmem:[#allocation8 + $0x2a8] sm:$0xff]
        %v612 = vld [vmem:[#allocation8 + $0x2b0] sm:$0xff]
        %v613 = vld [vmem:[#allocation8 + $0x2b8] sm:$0xff]
        %v614 = vld [vmem:[#allocation8 + $0x2c0] sm:$0xff]
        %v615 = vld [vmem:[#allocation8 + $0x2c8] sm:$0xff]
        %v616 = vld [vmem:[#allocation8 + $0x2d0] sm:$0xff]
        %v617 = vld [vmem:[#allocation8 + $0x2d8] sm:$0xff]
        %v618 = vld [vmem:[#allocation8 + $0x2e0] sm:$0xff]
        %v619 = vld [vmem:[#allocation8 + $0x2e8] sm:$0xff]
        %v620 = vld [vmem:[#allocation8 + $0x2f0] sm:$0xff]
        %v621 = vld [vmem:[#allocation8 + $0x2f8] sm:$0xff]
        %v622 = vld [vmem:[#allocation8 + $0x300] sm:$0xff]
        %v623 = vld [vmem:[#allocation8 + $0x308] sm:$0xff]
        %v624 = vld [vmem:[#allocation8 + $0x310] sm:$0xff]
        %v625 = vld [vmem:[#allocation8 + $0x318] sm:$0xff]
        %v626 = vld [vmem:[#allocation8 + $0x320] sm:$0xff]
        %v627 = vld [vmem:[#allocation8 + $0x328] sm:$0xff]
        %v628 = vld [vmem:[#allocation8 + $0x330] sm:$0xff]
        %v629 = vld [vmem:[#allocation8 + $0x338] sm:$0xff]
        %v630 = vld [vmem:[#allocation8 + $0x340] sm:$0xff]
        %v631 = vld [vmem:[#allocation8 + $0x348] sm:$0xff]
        %v632 = vld [vmem:[#allocation8 + $0x350] sm:$0xff]
        %v633 = vld [vmem:[#allocation8 + $0x358] sm:$0xff]
        %v634 = vld [vmem:[#allocation8 + $0x360] sm:$0xff]
        %v635 = vld [vmem:[#allocation8 + $0x368] sm:$0xff]
        %v636 = vld [vmem:[#allocation8 + $0x370] sm:$0xff]
        %v637 = vld [vmem:[#allocation8 + $0x378] sm:$0xff]
        %v638 = vld [vmem:[#allocation8 + $0x380] sm:$0xff]
        %v639 = vld [vmem:[#allocation8 + $0x388] sm:$0xff]
        %v640 = vld [vmem:[#allocation8 + $0x390] sm:$0xff]
        %v641 = vld [vmem:[#allocation8 + $0x398] sm:$0xff]
        %v642 = vld [vmem:[#allocation8 + $0x3a0] sm:$0xff]
        %v643 = vld [vmem:[#allocation8 + $0x3a8] sm:$0xff]
        %v644 = vld [vmem:[#allocation8 + $0x3b0] sm:$0xff]
        %v645 = vld [vmem:[#allocation8 + $0x3b8] sm:$0xff]
        %v646 = vld [vmem:[#allocation8 + $0x3c0] sm:$0xff]
        %v647 = vld [vmem:[#allocation8 + $0x3c8] sm:$0xff]
        %v648 = vld [vmem:[#allocation8 + $0x3d0] sm:$0xff]
        %v649 = vld [vmem:[#allocation8 + $0x3d8] sm:$0xff]
        %v650 = vld [vmem:[#allocation8 + $0x3e0] sm:$0xff]
        %v651 = vld [vmem:[#allocation8 + $0x3e8] sm:$0xff]
        %v652 = vld [vmem:[#allocation8 + $0x3f0] sm:$0xff]
        %v653 = vld [vmem:[#allocation8 + $0x3f8] sm:$0xff]
        %s654 = sld [smem:[#allocation2]]
        %v655 = vstv %s654
        %v784 = vunpack.c.l.b16 %v526
        %v785 = vunpack.c.h.b16 %v526
        %v786 = vunpack.c.l.b16 %v527
        %v787 = vunpack.c.h.b16 %v527
        %v788 = vunpack.c.l.b16 %v528
        %v789 = vunpack.c.h.b16 %v528
        %v790 = vunpack.c.l.b16 %v529
        %v791 = vunpack.c.h.b16 %v529
        %v792 = vunpack.c.l.b16 %v530
        %v793 = vunpack.c.h.b16 %v530
        %v794 = vunpack.c.l.b16 %v531
        %v795 = vunpack.c.h.b16 %v531
        %v796 = vunpack.c.l.b16 %v532
        %v797 = vunpack.c.h.b16 %v532
        %v798 = vunpack.c.l.b16 %v533
        %v799 = vunpack.c.h.b16 %v533
        %v800 = vunpack.c.l.b16 %v534
        %v801 = vunpack.c.h.b16 %v534
        %v802 = vunpack.c.l.b16 %v535
        %v803 = vunpack.c.h.b16 %v535
        %v804 = vunpack.c.l.b16 %v536
        %v805 = vunpack.c.h.b16 %v536
        %v806 = vunpack.c.l.b16 %v537
        %v807 = vunpack.c.h.b16 %v537
        %v808 = vunpack.c.l.b16 %v538
        %v809 = vunpack.c.h.b16 %v538
        %v810 = vunpack.c.l.b16 %v539
        %v811 = vunpack.c.h.b16 %v539
        %v812 = vunpack.c.l.b16 %v540
        %v813 = vunpack.c.h.b16 %v540
        %v814 = vunpack.c.l.b16 %v541
        %v815 = vunpack.c.h.b16 %v541
        %v816 = vunpack.c.l.b16 %v542
        %v817 = vunpack.c.h.b16 %v542
        %v818 = vunpack.c.l.b16 %v543
        %v819 = vunpack.c.h.b16 %v543
        %v820 = vunpack.c.l.b16 %v544
        %v821 = vunpack.c.h.b16 %v544
        %v822 = vunpack.c.l.b16 %v545
        %v823 = vunpack.c.h.b16 %v545
        %v824 = vunpack.c.l.b16 %v546
        %v825 = vunpack.c.h.b16 %v546
        %v826 = vunpack.c.l.b16 %v547
        %v827 = vunpack.c.h.b16 %v547
        %v828 = vunpack.c.l.b16 %v548
        %v829 = vunpack.c.h.b16 %v548
        %v830 = vunpack.c.l.b16 %v549
        %v831 = vunpack.c.h.b16 %v549
        %v832 = vunpack.c.l.b16 %v550
        %v833 = vunpack.c.h.b16 %v550
        %v834 = vunpack.c.l.b16 %v551
        %v835 = vunpack.c.h.b16 %v551
        %v836 = vunpack.c.l.b16 %v552
        %v837 = vunpack.c.h.b16 %v552
        %v838 = vunpack.c.l.b16 %v553
        %v839 = vunpack.c.h.b16 %v553
        %v840 = vunpack.c.l.b16 %v554
        %v841 = vunpack.c.h.b16 %v554
        %v842 = vunpack.c.l.b16 %v555
        %v843 = vunpack.c.h.b16 %v555
        %v844 = vunpack.c.l.b16 %v556
        %v845 = vunpack.c.h.b16 %v556
        %v846 = vunpack.c.l.b16 %v557
        %v847 = vunpack.c.h.b16 %v557
        %v848 = vunpack.c.l.b16 %v558
        %v849 = vunpack.c.h.b16 %v558
        %v850 = vunpack.c.l.b16 %v559
        %v851 = vunpack.c.h.b16 %v559
        %v852 = vunpack.c.l.b16 %v560
        %v853 = vunpack.c.h.b16 %v560
        %v854 = vunpack.c.l.b16 %v561
        %v855 = vunpack.c.h.b16 %v561
        %v856 = vunpack.c.l.b16 %v562
        %v857 = vunpack.c.h.b16 %v562
        %v858 = vunpack.c.l.b16 %v563
        %v859 = vunpack.c.h.b16 %v563
        %v860 = vunpack.c.l.b16 %v564
        %v861 = vunpack.c.h.b16 %v564
        %v862 = vunpack.c.l.b16 %v565
        %v863 = vunpack.c.h.b16 %v565
        %v864 = vunpack.c.l.b16 %v566
        %v865 = vunpack.c.h.b16 %v566
        %v866 = vunpack.c.l.b16 %v567
        %v867 = vunpack.c.h.b16 %v567
        %v868 = vunpack.c.l.b16 %v568
        %v869 = vunpack.c.h.b16 %v568
        %v870 = vunpack.c.l.b16 %v569
        %v871 = vunpack.c.h.b16 %v569
        %v872 = vunpack.c.l.b16 %v570
        %v873 = vunpack.c.h.b16 %v570
        %v874 = vunpack.c.l.b16 %v571
        %v875 = vunpack.c.h.b16 %v571
        %v876 = vunpack.c.l.b16 %v572
        %v877 = vunpack.c.h.b16 %v572
        %v878 = vunpack.c.l.b16 %v573
        %v879 = vunpack.c.h.b16 %v573
        %v880 = vunpack.c.l.b16 %v574
        %v881 = vunpack.c.h.b16 %v574
        %v882 = vunpack.c.l.b16 %v575
        %v883 = vunpack.c.h.b16 %v575
        %v884 = vunpack.c.l.b16 %v576
        %v885 = vunpack.c.h.b16 %v576
        %v886 = vunpack.c.l.b16 %v577
        %v887 = vunpack.c.h.b16 %v577
        %v888 = vunpack.c.l.b16 %v578
        %v889 = vunpack.c.h.b16 %v578
        %v890 = vunpack.c.l.b16 %v579
        %v891 = vunpack.c.h.b16 %v579
        %v892 = vunpack.c.l.b16 %v580
        %v893 = vunpack.c.h.b16 %v580
        %v894 = vunpack.c.l.b16 %v581
        %v895 = vunpack.c.h.b16 %v581
        %v896 = vunpack.c.l.b16 %v582
        %v897 = vunpack.c.h.b16 %v582
        %v898 = vunpack.c.l.b16 %v583
        %v899 = vunpack.c.h.b16 %v583
        %v900 = vunpack.c.l.b16 %v584
        %v901 = vunpack.c.h.b16 %v584
        %v902 = vunpack.c.l.b16 %v585
        %v903 = vunpack.c.h.b16 %v585
        %v904 = vunpack.c.l.b16 %v586
        %v905 = vunpack.c.h.b16 %v586
        %v906 = vunpack.c.l.b16 %v587
        %v907 = vunpack.c.h.b16 %v587
        %v908 = vunpack.c.l.b16 %v588
        %v909 = vunpack.c.h.b16 %v588
        %v910 = vunpack.c.l.b16 %v589
        %v911 = vunpack.c.h.b16 %v589
        %v912 = vunpack.c.l.b16 %v590
        %v913 = vunpack.c.h.b16 %v590
        %v914 = vunpack.c.l.b16 %v591
        %v915 = vunpack.c.h.b16 %v591
        %v916 = vunpack.c.l.b16 %v592
        %v917 = vunpack.c.h.b16 %v592
        %v918 = vunpack.c.l.b16 %v593
        %v919 = vunpack.c.h.b16 %v593
        %v920 = vunpack.c.l.b16 %v594
        %v921 = vunpack.c.h.b16 %v594
        %v922 = vunpack.c.l.b16 %v595
        %v923 = vunpack.c.h.b16 %v595
        %v924 = vunpack.c.l.b16 %v596
        %v925 = vunpack.c.h.b16 %v596
        %v926 = vunpack.c.l.b16 %v597
        %v927 = vunpack.c.h.b16 %v597
        %v928 = vunpack.c.l.b16 %v598
        %v929 = vunpack.c.h.b16 %v598
        %v930 = vunpack.c.l.b16 %v599
        %v931 = vunpack.c.h.b16 %v599
        %v932 = vunpack.c.l.b16 %v600
        %v933 = vunpack.c.h.b16 %v600
        %v934 = vunpack.c.l.b16 %v601
        %v935 = vunpack.c.h.b16 %v601
        %v936 = vunpack.c.l.b16 %v602
        %v937 = vunpack.c.h.b16 %v602
        %v938 = vunpack.c.l.b16 %v603
        %v939 = vunpack.c.h.b16 %v603
        %v940 = vunpack.c.l.b16 %v604
        %v941 = vunpack.c.h.b16 %v604
        %v942 = vunpack.c.l.b16 %v605
        %v943 = vunpack.c.h.b16 %v605
        %v944 = vunpack.c.l.b16 %v606
        %v945 = vunpack.c.h.b16 %v606
        %v946 = vunpack.c.l.b16 %v607
        %v947 = vunpack.c.h.b16 %v607
        %v948 = vunpack.c.l.b16 %v608
        %v949 = vunpack.c.h.b16 %v608
        %v950 = vunpack.c.l.b16 %v609
        %v951 = vunpack.c.h.b16 %v609
        %v952 = vunpack.c.l.b16 %v610
        %v953 = vunpack.c.h.b16 %v610
        %v954 = vunpack.c.l.b16 %v611
        %v955 = vunpack.c.h.b16 %v611
        %v956 = vunpack.c.l.b16 %v612
        %v957 = vunpack.c.h.b16 %v612
        %v958 = vunpack.c.l.b16 %v613
        %v959 = vunpack.c.h.b16 %v613
        %v960 = vunpack.c.l.b16 %v614
        %v961 = vunpack.c.h.b16 %v614
        %v962 = vunpack.c.l.b16 %v615
        %v963 = vunpack.c.h.b16 %v615
        %v964 = vunpack.c.l.b16 %v616
        %v965 = vunpack.c.h.b16 %v616
        %v966 = vunpack.c.l.b16 %v617
        %v967 = vunpack.c.h.b16 %v617
        %v968 = vunpack.c.l.b16 %v618
        %v969 = vunpack.c.h.b16 %v618
        %v970 = vunpack.c.l.b16 %v619
        %v971 = vunpack.c.h.b16 %v619
        %v972 = vunpack.c.l.b16 %v620
        %v973 = vunpack.c.h.b16 %v620
        %v974 = vunpack.c.l.b16 %v621
        %v975 = vunpack.c.h.b16 %v621
        %v976 = vunpack.c.l.b16 %v622
        %v977 = vunpack.c.h.b16 %v622
        %v978 = vunpack.c.l.b16 %v623
        %v979 = vunpack.c.h.b16 %v623
        %v980 = vunpack.c.l.b16 %v624
        %v981 = vunpack.c.h.b16 %v624
        %v982 = vunpack.c.l.b16 %v625
        %v983 = vunpack.c.h.b16 %v625
        %v984 = vunpack.c.l.b16 %v626
        %v985 = vunpack.c.h.b16 %v626
        %v986 = vunpack.c.l.b16 %v627
        %v987 = vunpack.c.h.b16 %v627
        %v988 = vunpack.c.l.b16 %v628
        %v989 = vunpack.c.h.b16 %v628
        %v990 = vunpack.c.l.b16 %v629
        %v991 = vunpack.c.h.b16 %v629
        %v992 = vunpack.c.l.b16 %v630
        %v993 = vunpack.c.h.b16 %v630
        %v994 = vunpack.c.l.b16 %v631
        %v995 = vunpack.c.h.b16 %v631
        %v996 = vunpack.c.l.b16 %v632
        %v997 = vunpack.c.h.b16 %v632
        %v998 = vunpack.c.l.b16 %v633
        %v999 = vunpack.c.h.b16 %v633
        %v1000 = vunpack.c.l.b16 %v634
        %v1001 = vunpack.c.h.b16 %v634
        %v1002 = vunpack.c.l.b16 %v635
        %v1003 = vunpack.c.h.b16 %v635
        %v1004 = vunpack.c.l.b16 %v636
        %v1005 = vunpack.c.h.b16 %v636
        %v1006 = vunpack.c.l.b16 %v637
        %v1007 = vunpack.c.h.b16 %v637
        %v1008 = vunpack.c.l.b16 %v638
        %v1009 = vunpack.c.h.b16 %v638
        %v1010 = vunpack.c.l.b16 %v639
        %v1011 = vunpack.c.h.b16 %v639
        %v1012 = vunpack.c.l.b16 %v640
        %v1013 = vunpack.c.h.b16 %v640
        %v1014 = vunpack.c.l.b16 %v641
        %v1015 = vunpack.c.h.b16 %v641
        %v1016 = vunpack.c.l.b16 %v642
        %v1017 = vunpack.c.h.b16 %v642
        %v1018 = vunpack.c.l.b16 %v643
        %v1019 = vunpack.c.h.b16 %v643
        %v1020 = vunpack.c.l.b16 %v644
        %v1021 = vunpack.c.h.b16 %v644
        %v1022 = vunpack.c.l.b16 %v645
        %v1023 = vunpack.c.h.b16 %v645
        %v1024 = vunpack.c.l.b16 %v646
        %v1025 = vunpack.c.h.b16 %v646
        %v1026 = vunpack.c.l.b16 %v647
        %v1027 = vunpack.c.h.b16 %v647
        %v1028 = vunpack.c.l.b16 %v648
        %v1029 = vunpack.c.h.b16 %v648
        %v1030 = vunpack.c.l.b16 %v649
        %v1031 = vunpack.c.h.b16 %v649
        %v1032 = vunpack.c.l.b16 %v650
        %v1033 = vunpack.c.h.b16 %v650
        %v1034 = vunpack.c.l.b16 %v651
        %v1035 = vunpack.c.h.b16 %v651
        %v1036 = vunpack.c.l.b16 %v652
        %v1037 = vunpack.c.h.b16 %v652
        %v1038 = vunpack.c.l.b16 %v653
        %v1039 = vunpack.c.h.b16 %v653
        %v1040 = vpack.c.b16 %v786, %v784
        %v1041 = vpack.c.b16 %v787, %v785
        %v1042 = vpack.c.b16 %v790, %v788
        %v1043 = vpack.c.b16 %v791, %v789
        %v1044 = vpack.c.b16 %v794, %v792
        %v1045 = vpack.c.b16 %v795, %v793
        %v1046 = vpack.c.b16 %v798, %v796
        %v1047 = vpack.c.b16 %v799, %v797
        %v1048 = vpack.c.b16 %v802, %v800
        %v1049 = vpack.c.b16 %v803, %v801
        %v1050 = vpack.c.b16 %v806, %v804
        %v1051 = vpack.c.b16 %v807, %v805
        %v1052 = vpack.c.b16 %v810, %v808
        %v1053 = vpack.c.b16 %v811, %v809
        %v1054 = vpack.c.b16 %v814, %v812
        %v1055 = vpack.c.b16 %v815, %v813
        %v1056 = vpack.c.b16 %v818, %v816
        %v1057 = vpack.c.b16 %v819, %v817
        %v1058 = vpack.c.b16 %v822, %v820
        %v1059 = vpack.c.b16 %v823, %v821
        %v1060 = vpack.c.b16 %v826, %v824
        %v1061 = vpack.c.b16 %v827, %v825
        %v1062 = vpack.c.b16 %v830, %v828
        %v1063 = vpack.c.b16 %v831, %v829
        %v1064 = vpack.c.b16 %v834, %v832
        %v1065 = vpack.c.b16 %v835, %v833
        %v1066 = vpack.c.b16 %v838, %v836
        %v1067 = vpack.c.b16 %v839, %v837
        %v1068 = vpack.c.b16 %v842, %v840
        %v1069 = vpack.c.b16 %v843, %v841
        %v1070 = vpack.c.b16 %v846, %v844
        %v1071 = vpack.c.b16 %v847, %v845
        %v1072 = vpack.c.b16 %v850, %v848
        %v1073 = vpack.c.b16 %v851, %v849
        %v1074 = vpack.c.b16 %v854, %v852
        %v1075 = vpack.c.b16 %v855, %v853
        %v1076 = vpack.c.b16 %v858, %v856
        %v1077 = vpack.c.b16 %v859, %v857
        %v1078 = vpack.c.b16 %v862, %v860
        %v1079 = vpack.c.b16 %v863, %v861
        %v1080 = vpack.c.b16 %v866, %v864
        %v1081 = vpack.c.b16 %v867, %v865
        %v1082 = vpack.c.b16 %v870, %v868
        %v1083 = vpack.c.b16 %v871, %v869
        %v1084 = vpack.c.b16 %v874, %v872
        %v1085 = vpack.c.b16 %v875, %v873
        %v1086 = vpack.c.b16 %v878, %v876
        %v1087 = vpack.c.b16 %v879, %v877
        %v1088 = vpack.c.b16 %v882, %v880
        %v1089 = vpack.c.b16 %v883, %v881
        %v1090 = vpack.c.b16 %v886, %v884
        %v1091 = vpack.c.b16 %v887, %v885
        %v1092 = vpack.c.b16 %v890, %v888
        %v1093 = vpack.c.b16 %v891, %v889
        %v1094 = vpack.c.b16 %v894, %v892
        %v1095 = vpack.c.b16 %v895, %v893
        %v1096 = vpack.c.b16 %v898, %v896
        %v1097 = vpack.c.b16 %v899, %v897
        %v1098 = vpack.c.b16 %v902, %v900
        %v1099 = vpack.c.b16 %v903, %v901
        %v1100 = vpack.c.b16 %v906, %v904
        %v1101 = vpack.c.b16 %v907, %v905
        %v1102 = vpack.c.b16 %v910, %v908
        %v1103 = vpack.c.b16 %v911, %v909
        %v1104 = vpack.c.b16 %v914, %v912
        %v1105 = vpack.c.b16 %v915, %v913
        %v1106 = vpack.c.b16 %v918, %v916
        %v1107 = vpack.c.b16 %v919, %v917
        %v1108 = vpack.c.b16 %v922, %v920
        %v1109 = vpack.c.b16 %v923, %v921
        %v1110 = vpack.c.b16 %v926, %v924
        %v1111 = vpack.c.b16 %v927, %v925
        %v1112 = vpack.c.b16 %v930, %v928
        %v1113 = vpack.c.b16 %v931, %v929
        %v1114 = vpack.c.b16 %v934, %v932
        %v1115 = vpack.c.b16 %v935, %v933
        %v1116 = vpack.c.b16 %v938, %v936
        %v1117 = vpack.c.b16 %v939, %v937
        %v1118 = vpack.c.b16 %v942, %v940
        %v1119 = vpack.c.b16 %v943, %v941
        %v1120 = vpack.c.b16 %v946, %v944
        %v1121 = vpack.c.b16 %v947, %v945
        %v1122 = vpack.c.b16 %v950, %v948
        %v1123 = vpack.c.b16 %v951, %v949
        %v1124 = vpack.c.b16 %v954, %v952
        %v1125 = vpack.c.b16 %v955, %v953
        %v1126 = vpack.c.b16 %v958, %v956
        %v1127 = vpack.c.b16 %v959, %v957
        %v1128 = vpack.c.b16 %v962, %v960
        %v1129 = vpack.c.b16 %v963, %v961
        %v1130 = vpack.c.b16 %v966, %v964
        %v1131 = vpack.c.b16 %v967, %v965
        %v1132 = vpack.c.b16 %v970, %v968
        %v1133 = vpack.c.b16 %v971, %v969
        %v1134 = vpack.c.b16 %v974, %v972
        %v1135 = vpack.c.b16 %v975, %v973
        %v1136 = vpack.c.b16 %v978, %v976
        %v1137 = vpack.c.b16 %v979, %v977
        %v1138 = vpack.c.b16 %v982, %v980
        %v1139 = vpack.c.b16 %v983, %v981
        %v1140 = vpack.c.b16 %v986, %v984
        %v1141 = vpack.c.b16 %v987, %v985
        %v1142 = vpack.c.b16 %v990, %v988
        %v1143 = vpack.c.b16 %v991, %v989
        %v1144 = vpack.c.b16 %v994, %v992
        %v1145 = vpack.c.b16 %v995, %v993
        %v1146 = vpack.c.b16 %v998, %v996
        %v1147 = vpack.c.b16 %v999, %v997
        %v1148 = vpack.c.b16 %v1002, %v1000
        %v1149 = vpack.c.b16 %v1003, %v1001
        %v1150 = vpack.c.b16 %v1006, %v1004
        %v1151 = vpack.c.b16 %v1007, %v1005
        %v1152 = vpack.c.b16 %v1010, %v1008
        %v1153 = vpack.c.b16 %v1011, %v1009
        %v1154 = vpack.c.b16 %v1014, %v1012
        %v1155 = vpack.c.b16 %v1015, %v1013
        %v1156 = vpack.c.b16 %v1018, %v1016
        %v1157 = vpack.c.b16 %v1019, %v1017
        %v1158 = vpack.c.b16 %v1022, %v1020
        %v1159 = vpack.c.b16 %v1023, %v1021
        %v1160 = vpack.c.b16 %v1026, %v1024
        %v1161 = vpack.c.b16 %v1027, %v1025
        %v1162 = vpack.c.b16 %v1030, %v1028
        %v1163 = vpack.c.b16 %v1031, %v1029
        %v1164 = vpack.c.b16 %v1034, %v1032
        %v1165 = vpack.c.b16 %v1035, %v1033
        %v1166 = vpack.c.b16 %v1038, %v1036
        %v1167 = vpack.c.b16 %v1039, %v1037
        %1296 = vmatprep.subr.bf16.mxu0 %v1041
        %1297 = vmatpush1.bf16.msra.mxu0 %v1040
        %1298 = vmatprep.subr.bf16.mxu0 %v1043
        %1299 = vmatpush1.bf16.msra.mxu0 %v1042
        %1300 = vmatprep.subr.bf16.mxu0 %v1045
        %1301 = vmatpush1.bf16.msra.mxu0 %v1044
        %1302 = vmatprep.subr.bf16.mxu0 %v1047
        %1303 = vmatpush1.bf16.msra.mxu0 %v1046
        %1304 = vmatprep.subr.bf16.mxu0 %v1049
        %1305 = vmatpush1.bf16.msra.mxu0 %v1048
        %1306 = vmatprep.subr.bf16.mxu0 %v1051
        %1307 = vmatpush1.bf16.msra.mxu0 %v1050
        %1308 = vmatprep.subr.bf16.mxu0 %v1053
        %1309 = vmatpush1.bf16.msra.mxu0 %v1052
        %1310 = vmatprep.subr.bf16.mxu0 %v1055
        %1311 = vmatpush1.bf16.msra.mxu0 %v1054
        %1312 = vmatprep.subr.bf16.mxu0 %v1057
        %1313 = vmatpush1.bf16.msra.mxu0 %v1056
        %1314 = vmatprep.subr.bf16.mxu0 %v1059
        %1315 = vmatpush1.bf16.msra.mxu0 %v1058
        %1316 = vmatprep.subr.bf16.mxu0 %v1061
        %1317 = vmatpush1.bf16.msra.mxu0 %v1060
        %1318 = vmatprep.subr.bf16.mxu0 %v1063
        %1319 = vmatpush1.bf16.msra.mxu0 %v1062
        %1320 = vmatprep.subr.bf16.mxu0 %v1065
        %1321 = vmatpush1.bf16.msra.mxu0 %v1064
        %1322 = vmatprep.subr.bf16.mxu0 %v1067
        %1323 = vmatpush1.bf16.msra.mxu0 %v1066
        %1324 = vmatprep.subr.bf16.mxu0 %v1069
        %1325 = vmatpush1.bf16.msra.mxu0 %v1068
        %1326 = vmatprep.subr.bf16.mxu0 %v1071
        %1327 = vmatpush1.bf16.msra.mxu0 %v1070
        %1328 = vmatprep.mubr.bf16.mxu0 %v519
        %1329 = vmatmul.mubr.bf16.gmra.mrb[0].mxu0 %v518
        %v1330 = vpop.f32.mrb[0].mxu0
        %v1331 = vadd.f32 %v655, %v1330
        %v1332 = vpop.f32.mrb[0].mxu0
        %v1333 = vadd.f32 %v655, %v1332
        %v1334 = vpop.f32.mrb[0].mxu0
        %v1335 = vpop.f32.mrb[0].mxu0
        %1336 = vdwg.mxu0
        %1337 = vmatprep.subr.bf16.mxu0 %v1073
        %1338 = vmatpush1.bf16.msra.mxu0 %v1072
        %1339 = vmatprep.subr.bf16.mxu0 %v1075
        %1340 = vmatpush1.bf16.msra.mxu0 %v1074
        %1341 = vmatprep.subr.bf16.mxu0 %v1077
        %1342 = vmatpush1.bf16.msra.mxu0 %v1076
        %1343 = vmatprep.subr.bf16.mxu0 %v1079
        %1344 = vmatpush1.bf16.msra.mxu0 %v1078
        %1345 = vmatprep.subr.bf16.mxu0 %v1081
        %1346 = vmatpush1.bf16.msra.mxu0 %v1080
        %1347 = vmatprep.subr.bf16.mxu0 %v1083
        %1348 = vmatpush1.bf16.msra.mxu0 %v1082
        %1349 = vmatprep.subr.bf16.mxu0 %v1085
        %1350 = vmatpush1.bf16.msra.mxu0 %v1084
        %1351 = vmatprep.subr.bf16.mxu0 %v1087
        %1352 = vmatpush1.bf16.msra.mxu0 %v1086
        %1353 = vmatprep.subr.bf16.mxu0 %v1089
        %1354 = vmatpush1.bf16.msra.mxu0 %v1088
        %1355 = vmatprep.subr.bf16.mxu0 %v1091
        %1356 = vmatpush1.bf16.msra.mxu0 %v1090
        %1357 = vmatprep.subr.bf16.mxu0 %v1093
        %1358 = vmatpush1.bf16.msra.mxu0 %v1092
        %1359 = vmatprep.subr.bf16.mxu0 %v1095
        %1360 = vmatpush1.bf16.msra.mxu0 %v1094
        %1361 = vmatprep.subr.bf16.mxu0 %v1097
        %1362 = vmatpush1.bf16.msra.mxu0 %v1096
        %1363 = vmatprep.subr.bf16.mxu0 %v1099
        %1364 = vmatpush1.bf16.msra.mxu0 %v1098
        %1365 = vmatprep.subr.bf16.mxu0 %v1101
        %1366 = vmatpush1.bf16.msra.mxu0 %v1100
        %1367 = vmatprep.subr.bf16.mxu0 %v1103
        %1368 = vmatpush1.bf16.msra.mxu0 %v1102
        %1369 = vmatprep.mubr.bf16.mxu0 %v521
        %1370 = vmatmul.mubr.bf16.gmra.mrb[0].mxu0 %v520
        %v1371 = vpop.f32.mrb[0].mxu0
        %v1372 = vadd.f32 %v1331, %v1371
        %v1373 = vpop.f32.mrb[0].mxu0
        %v1374 = vadd.f32 %v1333, %v1373
        %v1375 = vpop.f32.mrb[0].mxu0
        %v1376 = vpop.f32.mrb[0].mxu0
        %1377 = vdwg.mxu0
        %1378 = vmatprep.subr.bf16.mxu0 %v1105
        %1379 = vmatpush1.bf16.msra.mxu0 %v1104
        %1380 = vmatprep.subr.bf16.mxu0 %v1107
        %1381 = vmatpush1.bf16.msra.mxu0 %v1106
        %1382 = vmatprep.subr.bf16.mxu0 %v1109
        %1383 = vmatpush1.bf16.msra.mxu0 %v1108
        %1384 = vmatprep.subr.bf16.mxu0 %v1111
        %1385 = vmatpush1.bf16.msra.mxu0 %v1110
        %1386 = vmatprep.subr.bf16.mxu0 %v1113
        %1387 = vmatpush1.bf16.msra.mxu0 %v1112
        %1388 = vmatprep.subr.bf16.mxu0 %v1115
        %1389 = vmatpush1.bf16.msra.mxu0 %v1114
        %1390 = vmatprep.subr.bf16.mxu0 %v1117
        %1391 = vmatpush1.bf16.msra.mxu0 %v1116
        %1392 = vmatprep.subr.bf16.mxu0 %v1119
        %1393 = vmatpush1.bf16.msra.mxu0 %v1118
        %1394 = vmatprep.subr.bf16.mxu0 %v1121
        %1395 = vmatpush1.bf16.msra.mxu0 %v1120
        %1396 = vmatprep.subr.bf16.mxu0 %v1123
        %1397 = vmatpush1.bf16.msra.mxu0 %v1122
        %1398 = vmatprep.subr.bf16.mxu0 %v1125
        %1399 = vmatpush1.bf16.msra.mxu0 %v1124
        %1400 = vmatprep.subr.bf16.mxu0 %v1127
        %1401 = vmatpush1.bf16.msra.mxu0 %v1126
        %1402 = vmatprep.subr.bf16.mxu0 %v1129
        %1403 = vmatpush1.bf16.msra.mxu0 %v1128
        %1404 = vmatprep.subr.bf16.mxu0 %v1131
        %1405 = vmatpush1.bf16.msra.mxu0 %v1130
        %1406 = vmatprep.subr.bf16.mxu0 %v1133
        %1407 = vmatpush1.bf16.msra.mxu0 %v1132
        %1408 = vmatprep.subr.bf16.mxu0 %v1135
        %1409 = vmatpush1.bf16.msra.mxu0 %v1134
        %1410 = vmatprep.mubr.bf16.mxu0 %v523
        %1411 = vmatmul.mubr.bf16.gmra.mrb[0].mxu0 %v522
        %v1412 = vpop.f32.mrb[0].mxu0
        %v1413 = vadd.f32 %v1372, %v1412
        %v1414 = vpop.f32.mrb[0].mxu0
        %v1415 = vadd.f32 %v1374, %v1414
        %v1416 = vpop.f32.mrb[0].mxu0
        %v1417 = vpop.f32.mrb[0].mxu0
        %1418 = vdwg.mxu0
        %1419 = vmatprep.subr.bf16.mxu0 %v1137
        %1420 = vmatpush1.bf16.msra.mxu0 %v1136
        %1421 = vmatprep.subr.bf16.mxu0 %v1139
        %1422 = vmatpush1.bf16.msra.mxu0 %v1138
        %1423 = vmatprep.subr.bf16.mxu0 %v1141
        %1424 = vmatpush1.bf16.msra.mxu0 %v1140
        %1425 = vmatprep.subr.bf16.mxu0 %v1143
        %1426 = vmatpush1.bf16.msra.mxu0 %v1142
        %1427 = vmatprep.subr.bf16.mxu0 %v1145
        %1428 = vmatpush1.bf16.msra.mxu0 %v1144
        %1429 = vmatprep.subr.bf16.mxu0 %v1147
        %1430 = vmatpush1.bf16.msra.mxu0 %v1146
        %1431 = vmatprep.subr.bf16.mxu0 %v1149
        %1432 = vmatpush1.bf16.msra.mxu0 %v1148
        %1433 = vmatprep.subr.bf16.mxu0 %v1151
        %1434 = vmatpush1.bf16.msra.mxu0 %v1150
        %1435 = vmatprep.subr.bf16.mxu0 %v1153
        %1436 = vmatpush1.bf16.msra.mxu0 %v1152
        %1437 = vmatprep.subr.bf16.mxu0 %v1155
        %1438 = vmatpush1.bf16.msra.mxu0 %v1154
        %1439 = vmatprep.subr.bf16.mxu0 %v1157
        %1440 = vmatpush1.bf16.msra.mxu0 %v1156
        %1441 = vmatprep.subr.bf16.mxu0 %v1159
        %1442 = vmatpush1.bf16.msra.mxu0 %v1158
        %1443 = vmatprep.subr.bf16.mxu0 %v1161
        %1444 = vmatpush1.bf16.msra.mxu0 %v1160
        %1445 = vmatprep.subr.bf16.mxu0 %v1163
        %1446 = vmatpush1.bf16.msra.mxu0 %v1162
        %1447 = vmatprep.subr.bf16.mxu0 %v1165
        %1448 = vmatpush1.bf16.msra.mxu0 %v1164
        %1449 = vmatprep.subr.bf16.mxu0 %v1167
        %1450 = vmatpush1.bf16.msra.mxu0 %v1166
        %1451 = vmatprep.mubr.bf16.mxu0 %v525
        %1452 = vmatmul.mubr.bf16.gmra.mrb[0].mxu0 %v524
        %v1453 = vpop.f32.mrb[0].mxu0
        %v1454 = vadd.f32 %v1413, %v1453
        %v1455 = vpop.f32.mrb[0].mxu0
        %v1456 = vadd.f32 %v1415, %v1455
        %v1457 = vpop.f32.mrb[0].mxu0
        %v1458 = vpop.f32.mrb[0].mxu0
        %1459 = vdwg.mxu0
        %v1460 = vsub.f32 0.0, %v1454
        %v1461 = vsub.f32 0.0, %v1456
        %v1462 = vmul.f32 %v1460, 1.442695
        %v1463 = vpow.pop %v1462
        %v1464 = vmul.f32 %v1461, 1.442695
        %v1465 = vpow.pop %v1464
        %v1466 = vadd.f32 %v1463, 1.0
        %v1467 = vadd.f32 %v1465, 1.0
        %v1468 = vrcp.pop %v1466
        %v1469 = vmul.f32 1.0, %v1468
        %v1470 = vrcp.pop %v1467
        %v1471 = vmul.f32 1.0, %v1470
        %v1472 = vpack.c.bf16 %v1469, %v1469
        %v1473 = vpack.c.bf16 %v1471, %v1471
        %v1474 = vsub.f32 1.0, %v1469
        %v1475 = vsub.f32 1.0, %v1471
        %v1476 = vpack.c.bf16 %v1474, %v1474
        %v1477 = vpack.c.bf16 %v1475, %v1475
        %v1478 = vld [vmem:[%s3] sm:$0xf]
        %v1479 = vld [vmem:[%s3 + $0x4] sm:$0xf]
        %v1480 = vld [vmem:[%s3 + $0x8] sm:$0xf]
        %v1481 = vld [vmem:[%s3 + $0xc] sm:$0xf]
        %v1482 = vld [vmem:[%s3 + $0x10] sm:$0xf]
        %v1483 = vld [vmem:[%s3 + $0x14] sm:$0xf]
        %v1484 = vld [vmem:[%s3 + $0x18] sm:$0xf]
        %v1485 = vld [vmem:[%s3 + $0x1c] sm:$0xf]
        %v1486 = vld [vmem:[%s4] sm:$0xf]
        %v1487 = vld [vmem:[%s4 + $0x4] sm:$0xf]
        %v1488 = vld [vmem:[%s4 + $0x8] sm:$0xf]
        %v1489 = vld [vmem:[%s4 + $0xc] sm:$0xf]
        %v1490 = vld [vmem:[%s4 + $0x10] sm:$0xf]
        %v1491 = vld [vmem:[%s4 + $0x14] sm:$0xf]
        %v1492 = vld [vmem:[%s4 + $0x18] sm:$0xf]
        %v1493 = vld [vmem:[%s4 + $0x1c] sm:$0xf]
        %v1494 = vld [vmem:[%s5] sm:$0xff]
        %v1495 = vld [vmem:[%s5 + $0x8] sm:$0xff]
        %v1496 = vld [vmem:[%s5 + $0x10] sm:$0xff]
        %v1497 = vld [vmem:[%s5 + $0x18] sm:$0xff]
        %v1498 = vld [vmem:[%s5 + $0x20] sm:$0xff]
        %v1499 = vld [vmem:[%s5 + $0x28] sm:$0xff]
        %v1500 = vld [vmem:[%s5 + $0x30] sm:$0xff]
        %v1501 = vld [vmem:[%s5 + $0x38] sm:$0xff]
        %1503 = vset.pattern.permute.xlu0 0
        %1504 = vperm.xlu0 %1503, %v1494
        %v1505 = vpop.permute.xlu0 %1504
        %1508 = vset.pattern.permute.xlu0 0
        %1509 = vperm.xlu0 %1508, %v1495
        %v1510 = vpop.permute.xlu0 %1509
        %1513 = vset.pattern.permute.xlu0 0
        %1514 = vperm.xlu0 %1513, %v1496
        %v1515 = vpop.permute.xlu0 %1514
        %1518 = vset.pattern.permute.xlu0 0
        %1519 = vperm.xlu0 %1518, %v1497
        %v1520 = vpop.permute.xlu0 %1519
        %1523 = vset.pattern.permute.xlu0 0
        %1524 = vperm.xlu0 %1523, %v1498
        %v1525 = vpop.permute.xlu0 %1524
        %1528 = vset.pattern.permute.xlu0 0
        %1529 = vperm.xlu0 %1528, %v1499
        %v1530 = vpop.permute.xlu0 %1529
        %1533 = vset.pattern.permute.xlu0 0
        %1534 = vperm.xlu0 %1533, %v1500
        %v1535 = vpop.permute.xlu0 %1534
        %1538 = vset.pattern.permute.xlu0 0
        %1539 = vperm.xlu0 %1538, %v1501
        %v1540 = vpop.permute.xlu0 %1539
        %v1543 = vpack.i.b16 %v1472, %v1472
        %v1545 = vlaneseq
        %v1546 = vshrl.u32 %v1545, 7
        %v1547 = vsub.s32 0, %v1546
        %v1548 = vrot.slane %v1543, %v1547
        %v1550 = vpack.i.b16 %v1473, %v1473
        %v1552 = vlaneseq
        %v1553 = vshrl.u32 %v1552, 7
        %v1554 = vsub.s32 0, %v1553
        %v1555 = vrot.slane %v1550, %v1554
        %v1558 = vunpack.c.l.b16 %v1548
        %v1559 = vunpack.c.l.b16 %v1555
        %v1560 = vpack.c.b16 %v1559, %v1558
        %v1562 = vmul.bf16 %v353, %v1560
        %v1563 = vmul.bf16 %v354, %v1560
        %v1564 = vmul.bf16 %v355, %v1560
        %v1565 = vmul.bf16 %v356, %v1560
        %v1566 = vmul.bf16 %v357, %v1560
        %v1567 = vmul.bf16 %v358, %v1560
        %v1568 = vmul.bf16 %v359, %v1560
        %v1569 = vmul.bf16 %v360, %v1560
        %v1570 = vmax.bf16 %v1562, 0
        %v1571 = vmax.bf16 %v1563, 0
        %v1572 = vmax.bf16 %v1564, 0
        %v1573 = vmax.bf16 %v1565, 0
        %v1574 = vmax.bf16 %v1566, 0
        %v1575 = vmax.bf16 %v1567, 0
        %v1576 = vmax.bf16 %v1568, 0
        %v1577 = vmax.bf16 %v1569, 0
        %v1579 = vpack.i.b16 %v1476, %v1476
        %v1581 = vlaneseq
        %v1582 = vshrl.u32 %v1581, 7
        %v1583 = vsub.s32 0, %v1582
        %v1584 = vrot.slane %v1579, %v1583
        %v1586 = vpack.i.b16 %v1477, %v1477
        %v1588 = vlaneseq
        %v1589 = vshrl.u32 %v1588, 7
        %v1590 = vsub.s32 0, %v1589
        %v1591 = vrot.slane %v1586, %v1590
        %v1594 = vunpack.c.l.b16 %v1584
        %v1595 = vunpack.c.l.b16 %v1591
        %v1596 = vpack.c.b16 %v1595, %v1594
        %v1598 = vmul.bf16 %v377, %v1596
        %v1599 = vmul.bf16 %v378, %v1596
        %v1600 = vmul.bf16 %v379, %v1596
        %v1601 = vmul.bf16 %v380, %v1596
        %v1602 = vmul.bf16 %v381, %v1596
        %v1603 = vmul.bf16 %v382, %v1596
        %v1604 = vmul.bf16 %v383, %v1596
        %v1605 = vmul.bf16 %v384, %v1596
        %v1606 = vmax.bf16 %v1598, 0
        %v1607 = vmax.bf16 %v1599, 0
        %v1608 = vmax.bf16 %v1600, 0
        %v1609 = vmax.bf16 %v1601, 0
        %v1610 = vmax.bf16 %v1602, 0
        %v1611 = vmax.bf16 %v1603, 0
        %v1612 = vmax.bf16 %v1604, 0
        %v1613 = vmax.bf16 %v1605, 0
        %v1622 = vunpack.c.l.b16 %v1486
        %v1623 = vunpack.c.l.b16 %v1487
        %v1624 = vunpack.c.l.b16 %v1488
        %v1625 = vunpack.c.l.b16 %v1489
        %v1626 = vunpack.c.l.b16 %v1490
        %v1627 = vunpack.c.l.b16 %v1491
        %v1628 = vunpack.c.l.b16 %v1492
        %v1629 = vunpack.c.l.b16 %v1493
        %v1630 = vpack.c.b16 %v1623, %v1622
        %v1631 = vpack.c.b16 %v1625, %v1624
        %v1632 = vpack.c.b16 %v1627, %v1626
        %v1633 = vpack.c.b16 %v1629, %v1628
        %v1642 = vunpack.c.l.b16 %v1606
        %v1643 = vunpack.c.h.b16 %v1606
        %v1644 = vunpack.c.l.b16 %v1607
        %v1645 = vunpack.c.h.b16 %v1607
        %v1646 = vunpack.c.l.b16 %v1608
        %v1647 = vunpack.c.h.b16 %v1608
        %v1648 = vunpack.c.l.b16 %v1609
        %v1649 = vunpack.c.h.b16 %v1609
        %v1650 = vunpack.c.l.b16 %v1610
        %v1651 = vunpack.c.h.b16 %v1610
        %v1652 = vunpack.c.l.b16 %v1611
        %v1653 = vunpack.c.h.b16 %v1611
        %v1654 = vunpack.c.l.b16 %v1612
        %v1655 = vunpack.c.h.b16 %v1612
        %v1656 = vunpack.c.l.b16 %v1613
        %v1657 = vunpack.c.h.b16 %v1613
        %v1658 = vpack.c.b16 %v1644, %v1642
        %v1659 = vpack.c.b16 %v1645, %v1643
        %v1660 = vpack.c.b16 %v1648, %v1646
        %v1661 = vpack.c.b16 %v1649, %v1647
        %v1662 = vpack.c.b16 %v1652, %v1650
        %v1663 = vpack.c.b16 %v1653, %v1651
        %v1664 = vpack.c.b16 %v1656, %v1654
        %v1665 = vpack.c.b16 %v1657, %v1655
        %vm1674 = vcmask 523264
        %v1676 = vsel %vm1674, %v1630, 0
        %v1679 = vsel %vm1674, %v1631, 0
        %v1682 = vsel %vm1674, %v1632, 0
        %v1685 = vsel %vm1674, %v1633, 0
        %1687 = vmatprep.subr.bf16.mxu0 %v1659
        %1688 = vmatpush1.bf16.msra.mxu0 %v1658
        %1689 = vmatprep.subr.bf16.mxu0 %v1661
        %1690 = vmatpush1.bf16.msra.mxu0 %v1660
        %1691 = vmatprep.subr.bf16.mxu0 %v1663
        %1692 = vmatpush1.bf16.msra.mxu0 %v1662
        %1693 = vmatprep.subr.bf16.mxu0 %v1665
        %1694 = vmatpush1.bf16.msra.mxu0 %v1664
        %1695 = vmatprep.subr.bf16.mxu0 0
        %1696 = vmatpush1.bf16.msra.mxu0 0
        %1697 = vmatprep.subr.bf16.mxu0 0
        %1698 = vmatpush1.bf16.msra.mxu0 0
        %1699 = vmatprep.subr.bf16.mxu0 0
        %1700 = vmatpush1.bf16.msra.mxu0 0
        %1701 = vmatprep.subr.bf16.mxu0 0
        %1702 = vmatpush1.bf16.msra.mxu0 0
        %1703 = vmatprep.subr.bf16.mxu0 0
        %1704 = vmatpush1.bf16.msra.mxu0 0
        %1705 = vmatprep.subr.bf16.mxu0 0
        %1706 = vmatpush1.bf16.msra.mxu0 0
        %1707 = vmatprep.subr.bf16.mxu0 0
        %1708 = vmatpush1.bf16.msra.mxu0 0
        %1709 = vmatprep.subr.bf16.mxu0 0
        %1710 = vmatpush1.bf16.msra.mxu0 0
        %1711 = vmatprep.subr.bf16.mxu0 0
        %1712 = vmatpush1.bf16.msra.mxu0 0
        %1713 = vmatprep.subr.bf16.mxu0 0
        %1714 = vmatpush1.bf16.msra.mxu0 0
        %1715 = vmatprep.subr.bf16.mxu0 0
        %1716 = vmatpush1.bf16.msra.mxu0 0
        %1717 = vmatprep.subr.bf16.mxu0 0
        %1718 = vmatpush1.bf16.msra.mxu0 0
        %1719 = vmatprep.mubr.bf16.mxu0 0
        %1720 = vmatmul.mubr.bf16.gmra.mrb[0].mxu0 %v1676
        %v1721 = vpop.f32.mrb[0].mxu0
        %v1722 = vadd.f32 0.0, %v1721
        %v1723 = vpop.f32.mrb[0].mxu0
        %v1724 = vadd.f32 0.0, %v1723
        %v1725 = vpop.f32.mrb[0].mxu0
        %v1726 = vadd.f32 0.0, %v1725
        %v1727 = vpop.f32.mrb[0].mxu0
        %v1728 = vadd.f32 0.0, %v1727
        %1729 = vmatprep.mubr.bf16.mxu0 0
        %1730 = vmatmul.mubr.bf16.gmra.mrb[0].mxu0 %v1679
        %v1731 = vpop.f32.mrb[0].mxu0
        %v1732 = vadd.f32 0.0, %v1731
        %v1733 = vpop.f32.mrb[0].mxu0
        %v1734 = vadd.f32 0.0, %v1733
        %v1735 = vpop.f32.mrb[0].mxu0
        %v1736 = vadd.f32 0.0, %v1735
        %v1737 = vpop.f32.mrb[0].mxu0
        %v1738 = vadd.f32 0.0, %v1737
        %1739 = vmatprep.mubr.bf16.mxu0 0
        %1740 = vmatmul.mubr.bf16.gmra.mrb[0].mxu0 %v1682
        %v1741 = vpop.f32.mrb[0].mxu0
        %v1742 = vadd.f32 0.0, %v1741
        %v1743 = vpop.f32.mrb[0].mxu0
        %v1744 = vadd.f32 0.0, %v1743
        %v1745 = vpop.f32.mrb[0].mxu0
        %v1746 = vadd.f32 0.0, %v1745
        %v1747 = vpop.f32.mrb[0].mxu0
        %v1748 = vadd.f32 0.0, %v1747
        %1749 = vmatprep.mubr.bf16.mxu0 0
        %1750 = vmatmul.mubr.bf16.gmra.mrb[0].mxu0 %v1685
        %v1751 = vpop.f32.mrb[0].mxu0
        %v1752 = vadd.f32 0.0, %v1751
        %v1753 = vpop.f32.mrb[0].mxu0
        %v1754 = vadd.f32 0.0, %v1753
        %v1755 = vpop.f32.mrb[0].mxu0
        %v1756 = vadd.f32 0.0, %v1755
        %v1757 = vpop.f32.mrb[0].mxu0
        %v1758 = vadd.f32 0.0, %v1757
        %1759 = vdwg.mxu0
        %v1768 = vunpack.c.l.b16 %v1478
        %v1769 = vunpack.c.l.b16 %v1479
        %v1770 = vunpack.c.l.b16 %v1480
        %v1771 = vunpack.c.l.b16 %v1481
        %v1772 = vunpack.c.l.b16 %v1482
        %v1773 = vunpack.c.l.b16 %v1483
        %v1774 = vunpack.c.l.b16 %v1484
        %v1775 = vunpack.c.l.b16 %v1485
        %v1776 = vpack.c.b16 %v1769, %v1768
        %v1777 = vpack.c.b16 %v1771, %v1770
        %v1778 = vpack.c.b16 %v1773, %v1772
        %v1779 = vpack.c.b16 %v1775, %v1774
        %v1788 = vunpack.c.l.b16 %v1570
        %v1789 = vunpack.c.h.b16 %v1570
        %v1790 = vunpack.c.l.b16 %v1571
        %v1791 = vunpack.c.h.b16 %v1571
        %v1792 = vunpack.c.l.b16 %v1572
        %v1793 = vunpack.c.h.b16 %v1572
        %v1794 = vunpack.c.l.b16 %v1573
        %v1795 = vunpack.c.h.b16 %v1573
        %v1796 = vunpack.c.l.b16 %v1574
        %v1797 = vunpack.c.h.b16 %v1574
        %v1798 = vunpack.c.l.b16 %v1575
        %v1799 = vunpack.c.h.b16 %v1575
        %v1800 = vunpack.c.l.b16 %v1576
        %v1801 = vunpack.c.h.b16 %v1576
        %v1802 = vunpack.c.l.b16 %v1577
        %v1803 = vunpack.c.h.b16 %v1577
        %v1804 = vpack.c.b16 %v1790, %v1788
        %v1805 = vpack.c.b16 %v1791, %v1789
        %v1806 = vpack.c.b16 %v1794, %v1792
        %v1807 = vpack.c.b16 %v1795, %v1793
        %v1808 = vpack.c.b16 %v1798, %v1796
        %v1809 = vpack.c.b16 %v1799, %v1797
        %v1810 = vpack.c.b16 %v1802, %v1800
        %v1811 = vpack.c.b16 %v1803, %v1801
        %v1821 = vsel %vm1674, %v1776, 0
        %v1824 = vsel %vm1674, %v1777, 0
        %v1827 = vsel %vm1674, %v1778, 0
        %v1830 = vsel %vm1674, %v1779, 0
        %1832 = vmatprep.subr.bf16.mxu0 %v1805
        %1833 = vmatpush1.bf16.msra.mxu0 %v1804
        %1834 = vmatprep.subr.bf16.mxu0 %v1807
        %1835 = vmatpush1.bf16.msra.mxu0 %v1806
        %1836 = vmatprep.subr.bf16.mxu0 %v1809
        %1837 = vmatpush1.bf16.msra.mxu0 %v1808
        %1838 = vmatprep.subr.bf16.mxu0 %v1811
        %1839 = vmatpush1.bf16.msra.mxu0 %v1810
        %1840 = vmatprep.subr.bf16.mxu0 0
        %1841 = vmatpush1.bf16.msra.mxu0 0
        %1842 = vmatprep.subr.bf16.mxu0 0
        %1843 = vmatpush1.bf16.msra.mxu0 0
        %1844 = vmatprep.subr.bf16.mxu0 0
        %1845 = vmatpush1.bf16.msra.mxu0 0
        %1846 = vmatprep.subr.bf16.mxu0 0
        %1847 = vmatpush1.bf16.msra.mxu0 0
        %1848 = vmatprep.subr.bf16.mxu0 0
        %1849 = vmatpush1.bf16.msra.mxu0 0
        %1850 = vmatprep.subr.bf16.mxu0 0
        %1851 = vmatpush1.bf16.msra.mxu0 0
        %1852 = vmatprep.subr.bf16.mxu0 0
        %1853 = vmatpush1.bf16.msra.mxu0 0
        %1854 = vmatprep.subr.bf16.mxu0 0
        %1855 = vmatpush1.bf16.msra.mxu0 0
        %1856 = vmatprep.subr.bf16.mxu0 0
        %1857 = vmatpush1.bf16.msra.mxu0 0
        %1858 = vmatprep.subr.bf16.mxu0 0
        %1859 = vmatpush1.bf16.msra.mxu0 0
        %1860 = vmatprep.subr.bf16.mxu0 0
        %1861 = vmatpush1.bf16.msra.mxu0 0
        %1862 = vmatprep.subr.bf16.mxu0 0
        %1863 = vmatpush1.bf16.msra.mxu0 0
        %1864 = vmatprep.mubr.bf16.mxu0 0
        %1865 = vmatmul.mubr.bf16.gmra.mrb[0].mxu0 %v1821
        %v1866 = vpop.f32.mrb[0].mxu0
        %v1867 = vadd.f32 %v1722, %v1866
        %v1868 = vpop.f32.mrb[0].mxu0
        %v1869 = vadd.f32 %v1724, %v1868
        %v1870 = vpop.f32.mrb[0].mxu0
        %v1871 = vadd.f32 %v1726, %v1870
        %v1872 = vpop.f32.mrb[0].mxu0
        %v1873 = vadd.f32 %v1728, %v1872
        %1874 = vmatprep.mubr.bf16.mxu0 0
        %1875 = vmatmul.mubr.bf16.gmra.mrb[0].mxu0 %v1824
        %v1876 = vpop.f32.mrb[0].mxu0
        %v1877 = vadd.f32 %v1732, %v1876
        %v1878 = vpop.f32.mrb[0].mxu0
        %v1879 = vadd.f32 %v1734, %v1878
        %v1880 = vpop.f32.mrb[0].mxu0
        %v1881 = vadd.f32 %v1736, %v1880
        %v1882 = vpop.f32.mrb[0].mxu0
        %v1883 = vadd.f32 %v1738, %v1882
        %1884 = vmatprep.mubr.bf16.mxu0 0
        %1885 = vmatmul.mubr.bf16.gmra.mrb[0].mxu0 %v1827
        %v1886 = vpop.f32.mrb[0].mxu0
        %v1887 = vadd.f32 %v1742, %v1886
        %v1888 = vpop.f32.mrb[0].mxu0
        %v1889 = vadd.f32 %v1744, %v1888
        %v1890 = vpop.f32.mrb[0].mxu0
        %v1891 = vadd.f32 %v1746, %v1890
        %v1892 = vpop.f32.mrb[0].mxu0
        %v1893 = vadd.f32 %v1748, %v1892
        %1894 = vmatprep.mubr.bf16.mxu0 0
        %1895 = vmatmul.mubr.bf16.gmra.mrb[0].mxu0 %v1830
        %v1896 = vpop.f32.mrb[0].mxu0
        %v1897 = vadd.f32 %v1752, %v1896
        %v1898 = vpop.f32.mrb[0].mxu0
        %v1899 = vadd.f32 %v1754, %v1898
        %v1900 = vpop.f32.mrb[0].mxu0
        %v1901 = vadd.f32 %v1756, %v1900
        %v1902 = vpop.f32.mrb[0].mxu0
        %v1903 = vadd.f32 %v1758, %v1902
        %1904 = vdwg.mxu0
        %v1905 = vadd.f32 %v1867, %v1505
        %v1906 = vadd.f32 %v1869, %v1505
        %v1907 = vadd.f32 %v1871, %v1510
        %v1908 = vadd.f32 %v1873, %v1510
        %v1909 = vadd.f32 %v1877, %v1515
        %v1910 = vadd.f32 %v1879, %v1515
        %v1911 = vadd.f32 %v1881, %v1520
        %v1912 = vadd.f32 %v1883, %v1520
        %v1913 = vadd.f32 %v1887, %v1525
        %v1914 = vadd.f32 %v1889, %v1525
        %v1915 = vadd.f32 %v1891, %v1530
        %v1916 = vadd.f32 %v1893, %v1530
        %v1917 = vadd.f32 %v1897, %v1535
        %v1918 = vadd.f32 %v1899, %v1535
        %v1919 = vadd.f32 %v1901, %v1540
        %v1920 = vadd.f32 %v1903, %v1540
        %1921 = vst [vmem:[%s351] sm:$0xff] %v1905
        %1922 = vst [vmem:[%s351 + $0x8] sm:$0xff] %v1906
        %1923 = vst [vmem:[%s351 + $0x10] sm:$0xff] %v1907
        %1924 = vst [vmem:[%s351 + $0x18] sm:$0xff] %v1908
        %1925 = vst [vmem:[%s351 + $0x20] sm:$0xff] %v1909
        %1926 = vst [vmem:[%s351 + $0x28] sm:$0xff] %v1910
        %1927 = vst [vmem:[%s351 + $0x30] sm:$0xff] %v1911
        %1928 = vst [vmem:[%s351 + $0x38] sm:$0xff] %v1912
        %1929 = vst [vmem:[%s351 + $0x40] sm:$0xff] %v1913
        %1930 = vst [vmem:[%s351 + $0x48] sm:$0xff] %v1914
        %1931 = vst [vmem:[%s351 + $0x50] sm:$0xff] %v1915
        %1932 = vst [vmem:[%s351 + $0x58] sm:$0xff] %v1916
        %1933 = vst [vmem:[%s351 + $0x60] sm:$0xff] %v1917
        %1934 = vst [vmem:[%s351 + $0x68] sm:$0xff] %v1918
        %1935 = vst [vmem:[%s351 + $0x70] sm:$0xff] %v1919
        %1936 = vst [vmem:[%s351 + $0x78] sm:$0xff] %v1920
        %s1937 = sand.u32 %s193, 1
        %s1938 = scalar_lea.sflag [#allocation5], %s1937
        %s1939 = sand.u32 %s193, 1
        %s1940 = smul.addr %s1939, 128
        %s1941 = scalar_lea.vmem [#allocation9], %s1940
        // Predicated region
        $region61: #{tpu_custom_call.1} parent=47 // pred_check
          %p1942 = pneg %p203
        $region62: #{tpu_custom_call.1} parent=47 // pred_check_branch
          %1944 = sbr.rel (%p1942) target = $region64
        $region63: #{tpu_custom_call.1} parent=47 // pred_region
          %s1946 = ssub.s32 2048, 2048
          %1947 = vsyncadd %s1938, %s1946
          %s1948 = smul.addr %s28, 16
          %s1949 = smul.addr %s1948, 128
          %s1950 = scalar_lea.hbm %s7, %s1949
          %s1951 = sshll.u32 %s1941, 4
          %s1952 = int_to_ptr.vmem [resolvable:$true] %s1951
          %1957 = dma.vmem_to_hbm [thread:$0]  %s1952, 2048, %s1950, %s1938, 256, 256, 16
        $region64: #{tpu_custom_call.1} parent=47 // pred_fallthru
          _
      $region48: #{tpu_custom_call.1} parent=5 // pred_fallthru
        _
      %p1958 = scmp.le.s32.totalorder 2, %s23
      // Predicated region
      $region65: #{tpu_custom_call.1} parent=5 // pred_check
        %p1959 = pneg %p1958
      $region66: #{tpu_custom_call.1} parent=5 // pred_check_branch
        %1961 = sbr.rel (%p1959) target = $region68
      $region67: #{tpu_custom_call.1} parent=5 // pred_region
        %s1962 = ssub.s32 %s23, 2
        // Predicated region
        $region69: #{tpu_custom_call.1} parent=67 // pred_check
          %p1963 = pneg %p209
        $region70: #{tpu_custom_call.1} parent=67 // pred_check_branch
          %1965 = sbr.rel (%p1963) target = $region72
        $region71: #{tpu_custom_call.1} parent=67 // pred_region
          %s1966 = sand.u32 %s194, 1
          %s1967 = scalar_lea.sflag [#allocation5], %s1966
          %s1968 = sand.u32 %s194, 1
          %s1969 = smul.addr %s1968, 128
          %s1970 = scalar_lea.vmem [#allocation9], %s1969
          %1971 = dma.done %s1967, 2048
        $region72: #{tpu_custom_call.1} parent=67 // pred_fallthru
          _
      $region68: #{tpu_custom_call.1} parent=5 // pred_fallthru
        _
    $region6: #{tpu_custom_call.1} parent=1 // loop_footer
      %s27 = sadd.s32 1, %s23
    $region7: #{tpu_custom_call.1} parent=1 // loop_footer_branch
      %22 = sbr.rel target = $region3
    $region8: #{tpu_custom_call.1} parent=1 // loop_exit
      _
    %1972 = vsyncpa [#allocation4], 1
    %s1973 = scalar_lea.sflag [#allocation4], 1
    %1974 = vsyncpa %s1973, 1
    %1975 = vsyncpa [#allocation7], 1
    %s1976 = scalar_lea.sflag [#allocation7], 1
    %1977 = vsyncpa %s1976, 1
    %1978 = vsyncpa [#allocation5], 1
    %s1979 = scalar_lea.sflag [#allocation5], 1
    %1980 = vsyncpa %s1979, 1

</llo_original>
